<compile_context>
chip_gen: v7x
topology: tpu7x:2x2x1
jax: 0.10.0
libtpu: 0.0.40
codegen_flags: <defaults>
</compile_context>

<pallas_src>
import jax
import jax.numpy as jnp
from jax import lax
from jax.experimental import pallas as pl
from jax.experimental.pallas import tpu as pltpu

LANE = 128
DOT_DTYPE = jnp.bfloat16  # MXU operand dtype (accumulation stays f32)

PARAM_ORDER = [
    "wp1", "bp1", "wp2", "bp2",      # f_pixel  (two conv-bn-relu, BN folded)
    "wo1", "bo1", "wo2", "bo2",      # f_object (two conv-bn-relu)
    "wd", "bd",                      # f_down   (one conv-bn-relu)
    "wu", "bu",                      # f_up     (one conv-bn-relu)
    "wc_ctx", "wc_x", "bc",          # conv_bn_dropout (split concat matmul)
]


def _cbr(v, w_ref, b_ref):
    """1x1 conv (bf16 matmul, f32 acc) + folded-BN bias + ReLU (f32)."""
    y = jnp.dot(v.astype(DOT_DTYPE), w_ref[...], preferred_element_type=jnp.float32)
    return jnp.maximum(y + b_ref[...], 0.0)


def ocr_kernel(x_ref, proxy_ref,
               wp1, bp1, wp2, bp2,
               wo1, bo1, wo2, bo2,
               wd, bd, wu, bu,
               wc_ctx, wc_x, bc,
               out_ref):
    x = x_ref[0]          # (TL, C)  f32
    proxy = proxy_ref[0]  # (M,  C)  f32

    # f_pixel on this spatial tile (1/sqrt(K) already folded into wp2/bp2)
    q = _cbr(_cbr(x, wp1, bp1), wp2, bp2)        # (TL, Kp)
    # f_object / f_down on the proxy; recomputed per tile (cheap: M is small).
    # TODO(synk): for large M, stash k/v in VMEM scratch under
    # pl.when(pl.program_id(1) == 0) and mark the L axis "arbitrary".
    k = _cbr(_cbr(proxy, wo1, bo1), wo2, bo2)    # (M, Kp)
    v = _cbr(proxy, wd, bd)                      # (M, Kp)

    # sim = q @ k^T without materializing the transpose (contract last dims).
    sim = lax.dot_general(
        q.astype(DOT_DTYPE), k.astype(DOT_DTYPE),
        dimension_numbers=(((1,), (1,)), ((), ())),
        preferred_element_type=jnp.float32)      # (TL, M)

    # softmax over objects (f32; EUP reciprocal for the denominator)
    sim = sim - jnp.max(sim, axis=-1, keepdims=True)
    p = jnp.exp(sim)
    p = p * pl.reciprocal(jnp.sum(p, axis=-1, keepdims=True), approx=True)

    ctx = jnp.dot(p.astype(DOT_DTYPE), v.astype(DOT_DTYPE),
                  preferred_element_type=jnp.float32)        # (TL, Kp)
    ctx = _cbr(ctx, wu, bu)                                  # (TL, C)  f_up

    # conv_bn_dropout on cat([context, feats], channel) as a split matmul
    out = (jnp.dot(ctx.astype(DOT_DTYPE), wc_ctx[...], preferred_element_type=jnp.float32)
           + jnp.dot(x.astype(DOT_DTYPE), wc_x[...], preferred_element_type=jnp.float32))
    out = jnp.maximum(out + bc[...], 0.0)
    # TODO(synk): Dropout2d is identity here (eval mode); training-mode channel
    # dropout would need pltpu.prng_* masking.
    out_ref[0] = out.astype(out_ref.dtype)


def spatial_ocr_pallas(feats_nlc, proxy_nmc, prepared, out_channels, *,
                       tl=512, vmem_limit_bytes=48 * 1024 * 1024):
    """feats_nlc: (N, L, C) f32; proxy_nmc: (N, M, C) f32; prepared: prepare_params(...)."""
    N, L, C = feats_nlc.shape
    _, M, _ = proxy_nmc.shape
    Coutp = prepared["wc_ctx"].shape[1]          # lane-padded out channels

    # Pick a spatial tile that divides L (multiple of 8 for sublane alignment).
    # On v7x (64 MiB VMEM) prefer tl ~512-1024 at C=512 f32; v5e/v6e can go larger.
    tl = min(tl, L)
    if L % tl != 0 or (tl % 8 != 0 and tl != L):
        tl = next((t for t in range(min(tl, L), 0, -1)
                   if L % t == 0 and t % 8 == 0), L)

    weight_args = [prepared[name] for name in PARAM_ORDER]

    in_specs = [
        pl.BlockSpec((1, tl, C), lambda b, l: (b, l, 0)),   # spatial tile
        pl.BlockSpec((1, M, C), lambda b, l: (b, 0, 0)),    # proxy (resident)
    ] + [pl.BlockSpec(w.shape, lambda b, l: (0, 0)) for w in weight_args]

    out_padded = pl.pallas_call(
        ocr_kernel,
        out_shape=jax.ShapeDtypeStruct((N, L, Coutp), feats_nlc.dtype),
        grid=(N, L // tl),
        in_specs=in_specs,
        out_specs=pl.BlockSpec((1, tl, Coutp), lambda b, l: (b, l, 0)),
        compiler_params=pltpu.CompilerParams(
            dimension_semantics=("parallel", "parallel"),
            vmem_limit_bytes=vmem_limit_bytes),
    )(feats_nlc, proxy_nmc, *weight_args)

    return out_padded[:, :, :out_channels]


# ----------------------------- parameter prep --------------------------------

def _round_up(x, m):
    return (x + m - 1) // m * m


def _pad2(a, rows=None, cols=None):
    r = a.shape[0] if rows is None else rows
    c = a.shape[1] if cols is None else cols
    return jnp.pad(a, ((0, r - a.shape[0]), (0, c - a.shape[1])))


def prepare_params(p, key_channels, lane=LANE):
    """Fold BN scales into weights, fold the attention 1/sqrt(K) scale into the
    second f_pixel layer, zero-pad key/out channel dims to lane multiples, and
    cast matmul weights to bf16 (biases stay f32)."""
    K = key_channels
    Cout = p["wc_ctx"].shape[1]
    Kp = _round_up(K, lane)
    Coutp = _round_up(Cout, lane)
    c = K ** -0.5

    def fold(suffix, extra=1.0):
        w = p["w" + suffix] * p["s" + suffix] * extra
        b = p["b" + suffix] * extra
        return w, b

    out = {}
    w, b = fold("p1"); out["wp1"], out["bp1"] = _pad2(w, cols=Kp), _pad2(b, cols=Kp)
    w, b = fold("p2", c); out["wp2"], out["bp2"] = _pad2(w, rows=Kp, cols=Kp), _pad2(b, cols=Kp)
    w, b = fold("o1"); out["wo1"], out["bo1"] = _pad2(w, cols=Kp), _pad2(b, cols=Kp)
    w, b = fold("o2"); out["wo2"], out["bo2"] = _pad2(w, rows=Kp, cols=Kp), _pad2(b, cols=Kp)
    w, b = fold("d"); out["wd"], out["bd"] = _pad2(w, cols=Kp), _pad2(b, cols=Kp)
    w, b = fold("u"); out["wu"], out["bu"] = _pad2(w, rows=Kp), b
    out["wc_ctx"] = _pad2(p["wc_ctx"] * p["sc"], cols=Coutp)
    out["wc_x"] = _pad2(p["wc_x"] * p["sc"], cols=Coutp)
    out["bc"] = _pad2(p["bc"], cols=Coutp)

    for name in out:
        if name.startswith("w"):
            out[name] = out[name].astype(DOT_DTYPE)
        else:
            out[name] = out[name].astype(jnp.float32)
    return out


def _conv_bn_params(key, cin, cout):
    """Deterministic conv weight + BN(eval) as (W[cin,cout], scale, bias)."""
    k1, k2, k3, k4, k5 = jax.random.split(key, 5)
    w = jax.random.normal(k1, (cin, cout), jnp.float32) / jnp.sqrt(cin).astype(jnp.float32)
    gamma = jax.random.uniform(k2, (cout,), jnp.float32, 0.5, 1.5)
    beta = jax.random.normal(k3, (cout,), jnp.float32) * 0.1
    mean = jax.random.normal(k4, (cout,), jnp.float32) * 0.1
    var = jax.random.uniform(k5, (cout,), jnp.float32, 0.5, 1.5)
    s = gamma / jnp.sqrt(var + 1e-5)
    b = beta - mean * s
    return w, s.reshape(1, cout), b.reshape(1, cout)


def init_params(key, C, K, Cout):
    ks = jax.random.split(key, 7)
    p = {}
    p["wp1"], p["sp1"], p["bp1"] = _conv_bn_params(ks[0], C, K)
    p["wp2"], p["sp2"], p["bp2"] = _conv_bn_params(ks[1], K, K)
    p["wo1"], p["so1"], p["bo1"] = _conv_bn_params(ks[2], C, K)
    p["wo2"], p["so2"], p["bo2"] = _conv_bn_params(ks[3], K, K)
    p["wd"], p["sd"], p["bd"] = _conv_bn_params(ks[4], C, K)
    p["wu"], p["su"], p["bu"] = _conv_bn_params(ks[5], K, C)
    wcat, p["sc"], p["bc"] = _conv_bn_params(ks[6], 2 * C, Cout)
    # torch.cat([context, feats], 1): first C input channels -> context, rest -> feats
    p["wc_ctx"], p["wc_x"] = wcat[:C], wcat[C:]
    return p


def ref_forward(feats_nlc, proxy_nmc, p):
    """Pure-JAX f32 reference with identical math (for correctness check)."""
    def cbr(v, w, s, b):
        return jnp.maximum(v @ w * s + b, 0.0)
    q = cbr(cbr(feats_nlc, p["wp1"], p["sp1"], p["bp1"]), p["wp2"], p["sp2"], p["bp2"])
    k = cbr(cbr(proxy_nmc, p["wo1"], p["so1"], p["bo1"]), p["wo2"], p["so2"], p["bo2"])
    v = cbr(proxy_nmc, p["wd"], p["sd"], p["bd"])
    sim = jnp.einsum("blk,bmk->blm", q, k) * (q.shape[-1] ** -0.5)
    sim = jax.nn.softmax(sim, axis=-1)
    ctx = jnp.einsum("blm,bmk->blk", sim, v)
    ctx = cbr(ctx, p["wu"], p["su"], p["bu"])
    out = ctx @ p["wc_ctx"] + feats_nlc @ p["wc_x"]
    return jnp.maximum(out * p["sc"] + p["bc"], 0.0)


if __name__ == "__main__":
    N, C, H, W, M = 2, 32, 16, 16, 8   # batch, in_channels, spatial, spatial, #proxy objects
    K, Cout = 16, 32                   # key_channels, out_channels

    key = jax.random.PRNGKey(0)
    kf, kp, kw = jax.random.split(key, 3)

    # PyTorch-convention inputs: feats NCHW, proxy N x C x M
    feats_nchw = jax.random.normal(kf, (N, C, H, W), jnp.float32)
    proxy_ncm = jax.random.normal(kp, (N, C, M), jnp.float32)
    params = init_params(kw, C, K, Cout)

    # glue: NCHW -> (N, H*W, C) ; N,C,M -> (N, M, C)
    feats_nlc = feats_nchw.transpose(0, 2, 3, 1).reshape(N, H * W, C)
    proxy_nmc = proxy_ncm.transpose(0, 2, 1)

    prepared = prepare_params(params, K)
    # tl=128 so the demo (L=256) exercises the multi-tile spatial grid.
    out_nlc = spatial_ocr_pallas(feats_nlc, proxy_nmc, prepared, Cout, tl=128)
    out_nchw = out_nlc.reshape(N, H, W, Cout).transpose(0, 3, 1, 2)  # back to NCHW
    jax.block_until_ready(out_nchw)

    ref = ref_forward(feats_nlc, proxy_nmc, params)
    assert out_nchw.shape == (N, Cout, H, W)
    max_err = float(jnp.max(jnp.abs(out_nlc - ref)))
    # bf16 matmul operands + approx reciprocal -> loosened tolerance vs f32 ref
    assert jnp.allclose(out_nlc, ref, atol=1e-1, rtol=5e-2), f"mismatch vs ref, max_err={max_err}"

    print("KERNEL_OK")
</pallas_src>

<mosaic_0001>
module attributes {stable_mosaic.version = 11 : i64} {
  func.func @ocr_kernel(%arg0: i32, %arg1: i32, %arg2: memref<1x128x32xf32, #tpu.memory_space<vmem>>, %arg3: memref<1x8x32xf32, #tpu.memory_space<vmem>>, %arg4: memref<32x128xbf16, #tpu.memory_space<vmem>>, %arg5: memref<1x128xf32, #tpu.memory_space<vmem>>, %arg6: memref<128x128xbf16, #tpu.memory_space<vmem>>, %arg7: memref<1x128xf32, #tpu.memory_space<vmem>>, %arg8: memref<32x128xbf16, #tpu.memory_space<vmem>>, %arg9: memref<1x128xf32, #tpu.memory_space<vmem>>, %arg10: memref<128x128xbf16, #tpu.memory_space<vmem>>, %arg11: memref<1x128xf32, #tpu.memory_space<vmem>>, %arg12: memref<32x128xbf16, #tpu.memory_space<vmem>>, %arg13: memref<1x128xf32, #tpu.memory_space<vmem>>, %arg14: memref<128x32xbf16, #tpu.memory_space<vmem>>, %arg15: memref<1x32xf32, #tpu.memory_space<vmem>>, %arg16: memref<32x128xbf16, #tpu.memory_space<vmem>>, %arg17: memref<32x128xbf16, #tpu.memory_space<vmem>>, %arg18: memref<1x128xf32, #tpu.memory_space<vmem>>, %arg19: memref<1x128x128xf32, #tpu.memory_space<vmem>>) attributes {dimension_semantics = [#tpu.dimension_semantics<parallel>, #tpu.dimension_semantics<parallel>], iteration_bounds = array<i64: 2, 2>, scalar_prefetch = 0 : i64, scratch_operands = 0 : i64, tpu.core_type = #tpu.core_type<tc>, window_params = [{transform_indices = @transform_0, window_bounds = array<i64: 1, 128, 32>}, {transform_indices = @transform_1, window_bounds = array<i64: 1, 8, 32>}, {pipeline_mode = #tpu.pipeline_mode<synchronous>, transform_indices = @transform_2, window_bounds = array<i64: 32, 128>}, {pipeline_mode = #tpu.pipeline_mode<synchronous>, transform_indices = @transform_3, window_bounds = array<i64: 1, 128>}, {pipeline_mode = #tpu.pipeline_mode<synchronous>, transform_indices = @transform_4, window_bounds = array<i64: 128, 128>}, {pipeline_mode = #tpu.pipeline_mode<synchronous>, transform_indices = @transform_5, window_bounds = array<i64: 1, 128>}, {pipeline_mode = #tpu.pipeline_mode<synchronous>, transform_indices = @transform_6, window_bounds = array<i64: 32, 128>}, {pipeline_mode = #tpu.pipeline_mode<synchronous>, transform_indices = @transform_7, window_bounds = array<i64: 1, 128>}, {pipeline_mode = #tpu.pipeline_mode<synchronous>, transform_indices = @transform_8, window_bounds = array<i64: 128, 128>}, {pipeline_mode = #tpu.pipeline_mode<synchronous>, transform_indices = @transform_9, window_bounds = array<i64: 1, 128>}, {pipeline_mode = #tpu.pipeline_mode<synchronous>, transform_indices = @transform_10, window_bounds = array<i64: 32, 128>}, {pipeline_mode = #tpu.pipeline_mode<synchronous>, transform_indices = @transform_11, window_bounds = array<i64: 1, 128>}, {pipeline_mode = #tpu.pipeline_mode<synchronous>, transform_indices = @transform_12, window_bounds = array<i64: 128, 32>}, {pipeline_mode = #tpu.pipeline_mode<synchronous>, transform_indices = @transform_13, window_bounds = array<i64: 1, 32>}, {pipeline_mode = #tpu.pipeline_mode<synchronous>, transform_indices = @transform_14, window_bounds = array<i64: 32, 128>}, {pipeline_mode = #tpu.pipeline_mode<synchronous>, transform_indices = @transform_15, window_bounds = array<i64: 32, 128>}, {pipeline_mode = #tpu.pipeline_mode<synchronous>, transform_indices = @transform_16, window_bounds = array<i64: 1, 128>}, {transform_indices = @transform_17, window_bounds = array<i64: 1, 128, 128>}]} {
    %c0 = arith.constant 0 : index
    %c0_0 = arith.constant 0 : index
    %c0_1 = arith.constant 0 : index
    %0 = vector.load %arg2[%c0, %c0_0, %c0_1] : memref<1x128x32xf32, #tpu.memory_space<vmem>>, vector<1x128x32xf32>
    %1 = vector.shape_cast %0 : vector<1x128x32xf32> to vector<128x32xf32>
    %c0_2 = arith.constant 0 : index
    %c0_3 = arith.constant 0 : index
    %c0_4 = arith.constant 0 : index
    %2 = vector.load %arg3[%c0_2, %c0_3, %c0_4] : memref<1x8x32xf32, #tpu.memory_space<vmem>>, vector<1x8x32xf32>
    %3 = vector.shape_cast %2 : vector<1x8x32xf32> to vector<8x32xf32>
    %4 = arith.truncf %1 : vector<128x32xf32> to vector<128x32xbf16>
    %c0_5 = arith.constant 0 : index
    %c0_6 = arith.constant 0 : index
    %5 = vector.load %arg4[%c0_5, %c0_6] : memref<32x128xbf16, #tpu.memory_space<vmem>>, vector<32x128xbf16>
    %cst = arith.constant dense<0.000000e+00> : vector<128x128xf32>
    %6 = tpu.matmul %4, %5, %cst {dimension_numbers = #tpu.dot_dimension_numbers<[1], [0], [0], [1], [0, 0, 1, 1], [], []>} : vector<128x32xbf16>, vector<32x128xbf16>, vector<128x128xf32> -> vector<128x128xf32>
    %c0_7 = arith.constant 0 : index
    %c0_8 = arith.constant 0 : index
    %7 = vector.load %arg5[%c0_7, %c0_8] : memref<1x128xf32, #tpu.memory_space<vmem>>, vector<1x128xf32>
    %8 = vector.broadcast %7 : vector<1x128xf32> to vector<128x128xf32>
    %9 = arith.addf %6, %8 : vector<128x128xf32>
    %cst_9 = arith.constant 0.000000e+00 : f32
    %10 = vector.broadcast %cst_9 : f32 to vector<128x128xf32>
    %11 = arith.maximumf %9, %10 : vector<128x128xf32>
    %12 = arith.truncf %11 : vector<128x128xf32> to vector<128x128xbf16>
    %c0_10 = arith.constant 0 : index
    %c0_11 = arith.constant 0 : index
    %13 = vector.load %arg6[%c0_10, %c0_11] : memref<128x128xbf16, #tpu.memory_space<vmem>>, vector<128x128xbf16>
    %cst_12 = arith.constant dense<0.000000e+00> : vector<128x128xf32>
    %14 = tpu.matmul %12, %13, %cst_12 {dimension_numbers = #tpu.dot_dimension_numbers<[1], [0], [0], [1], [0, 0, 1, 1], [], []>} : vector<128x128xbf16>, vector<128x128xbf16>, vector<128x128xf32> -> vector<128x128xf32>
    %c0_13 = arith.constant 0 : index
    %c0_14 = arith.constant 0 : index
    %15 = vector.load %arg7[%c0_13, %c0_14] : memref<1x128xf32, #tpu.memory_space<vmem>>, vector<1x128xf32>
    %16 = vector.broadcast %15 : vector<1x128xf32> to vector<128x128xf32>
    %17 = arith.addf %14, %16 : vector<128x128xf32>
    %cst_15 = arith.constant 0.000000e+00 : f32
    %18 = vector.broadcast %cst_15 : f32 to vector<128x128xf32>
    %19 = arith.maximumf %17, %18 : vector<128x128xf32>
    %20 = arith.truncf %3 : vector<8x32xf32> to vector<8x32xbf16>
    %c0_16 = arith.constant 0 : index
    %c0_17 = arith.constant 0 : index
    %21 = vector.load %arg8[%c0_16, %c0_17] : memref<32x128xbf16, #tpu.memory_space<vmem>>, vector<32x128xbf16>
    %cst_18 = arith.constant dense<0.000000e+00> : vector<8x128xf32>
    %22 = tpu.matmul %20, %21, %cst_18 {dimension_numbers = #tpu.dot_dimension_numbers<[1], [0], [0], [1], [0, 0, 1, 1], [], []>} : vector<8x32xbf16>, vector<32x128xbf16>, vector<8x128xf32> -> vector<8x128xf32>
    %c0_19 = arith.constant 0 : index
    %c0_20 = arith.constant 0 : index
    %23 = vector.load %arg9[%c0_19, %c0_20] : memref<1x128xf32, #tpu.memory_space<vmem>>, vector<1x128xf32>
    %24 = vector.broadcast %23 : vector<1x128xf32> to vector<8x128xf32>
    %25 = arith.addf %22, %24 : vector<8x128xf32>
    %cst_21 = arith.constant 0.000000e+00 : f32
    %26 = vector.broadcast %cst_21 : f32 to vector<8x128xf32>
    %27 = arith.maximumf %25, %26 : vector<8x128xf32>
    %28 = arith.truncf %27 : vector<8x128xf32> to vector<8x128xbf16>
    %c0_22 = arith.constant 0 : index
    %c0_23 = arith.constant 0 : index
    %29 = vector.load %arg10[%c0_22, %c0_23] : memref<128x128xbf16, #tpu.memory_space<vmem>>, vector<128x128xbf16>
    %cst_24 = arith.constant dense<0.000000e+00> : vector<8x128xf32>
    %30 = tpu.matmul %28, %29, %cst_24 {dimension_numbers = #tpu.dot_dimension_numbers<[1], [0], [0], [1], [0, 0, 1, 1], [], []>} : vector<8x128xbf16>, vector<128x128xbf16>, vector<8x128xf32> -> vector<8x128xf32>
    %c0_25 = arith.constant 0 : index
    %c0_26 = arith.constant 0 : index
    %31 = vector.load %arg11[%c0_25, %c0_26] : memref<1x128xf32, #tpu.memory_space<vmem>>, vector<1x128xf32>
    %32 = vector.broadcast %31 : vector<1x128xf32> to vector<8x128xf32>
    %33 = arith.addf %30, %32 : vector<8x128xf32>
    %cst_27 = arith.constant 0.000000e+00 : f32
    %34 = vector.broadcast %cst_27 : f32 to vector<8x128xf32>
    %35 = arith.maximumf %33, %34 : vector<8x128xf32>
    %36 = arith.truncf %3 : vector<8x32xf32> to vector<8x32xbf16>
    %c0_28 = arith.constant 0 : index
    %c0_29 = arith.constant 0 : index
    %37 = vector.load %arg12[%c0_28, %c0_29] : memref<32x128xbf16, #tpu.memory_space<vmem>>, vector<32x128xbf16>
    %cst_30 = arith.constant dense<0.000000e+00> : vector<8x128xf32>
    %38 = tpu.matmul %36, %37, %cst_30 {dimension_numbers = #tpu.dot_dimension_numbers<[1], [0], [0], [1], [0, 0, 1, 1], [], []>} : vector<8x32xbf16>, vector<32x128xbf16>, vector<8x128xf32> -> vector<8x128xf32>
    %c0_31 = arith.constant 0 : index
    %c0_32 = arith.constant 0 : index
    %39 = vector.load %arg13[%c0_31, %c0_32] : memref<1x128xf32, #tpu.memory_space<vmem>>, vector<1x128xf32>
    %40 = vector.broadcast %39 : vector<1x128xf32> to vector<8x128xf32>
    %41 = arith.addf %38, %40 : vector<8x128xf32>
    %cst_33 = arith.constant 0.000000e+00 : f32
    %42 = vector.broadcast %cst_33 : f32 to vector<8x128xf32>
    %43 = arith.maximumf %41, %42 : vector<8x128xf32>
    %44 = arith.truncf %19 : vector<128x128xf32> to vector<128x128xbf16>
    %45 = arith.truncf %35 : vector<8x128xf32> to vector<8x128xbf16>
    %cst_34 = arith.constant dense<0.000000e+00> : vector<128x8xf32>
    %46 = tpu.matmul %44, %45, %cst_34 {dimension_numbers = #tpu.dot_dimension_numbers<[1], [1], [0], [0], [0, 0, 1, 0], [], []>} : vector<128x128xbf16>, vector<8x128xbf16>, vector<128x8xf32> -> vector<128x8xf32>
    %cst_35 = arith.constant dense<0xFF800000> : vector<128xf32>
    %47 = vector.multi_reduction <maximumf>, %46, %cst_35 [1] : vector<128x8xf32> to vector<128xf32>
    %48 = vector.shape_cast %47 : vector<128xf32> to vector<128x1xf32>
    %49 = vector.broadcast %48 : vector<128x1xf32> to vector<128x8xf32>
    %50 = arith.subf %46, %49 : vector<128x8xf32>
    %51 = math.exp %50 : vector<128x8xf32>
    %cst_36 = arith.constant dense<0.000000e+00> : vector<128xf32>
    %52 = vector.multi_reduction <add>, %51, %cst_36 [1] : vector<128x8xf32> to vector<128xf32>
    %53 = vector.shape_cast %52 : vector<128xf32> to vector<128x1xf32>
    %54 = tpu.reciprocal %53 {approx = true} : vector<128x1xf32> -> vector<128x1xf32>
    %55 = vector.broadcast %54 : vector<128x1xf32> to vector<128x8xf32>
    %56 = arith.mulf %51, %55 : vector<128x8xf32>
    %57 = arith.truncf %56 : vector<128x8xf32> to vector<128x8xbf16>
    %58 = arith.truncf %43 : vector<8x128xf32> to vector<8x128xbf16>
    %cst_37 = arith.constant dense<0.000000e+00> : vector<128x128xf32>
    %59 = tpu.matmul %57, %58, %cst_37 {dimension_numbers = #tpu.dot_dimension_numbers<[1], [0], [0], [1], [0, 0, 1, 1], [], []>} : vector<128x8xbf16>, vector<8x128xbf16>, vector<128x128xf32> -> vector<128x128xf32>
    %60 = arith.truncf %59 : vector<128x128xf32> to vector<128x128xbf16>
    %c0_38 = arith.constant 0 : index
    %c0_39 = arith.constant 0 : index
    %61 = vector.load %arg14[%c0_38, %c0_39] : memref<128x32xbf16, #tpu.memory_space<vmem>>, vector<128x32xbf16>
    %cst_40 = arith.constant dense<0.000000e+00> : vector<128x32xf32>
    %62 = tpu.matmul %60, %61, %cst_40 {dimension_numbers = #tpu.dot_dimension_numbers<[1], [0], [0], [1], [0, 0, 1, 1], [], []>} : vector<128x128xbf16>, vector<128x32xbf16>, vector<128x32xf32> -> vector<128x32xf32>
    %c0_41 = arith.constant 0 : index
    %c0_42 = arith.constant 0 : index
    %63 = vector.load %arg15[%c0_41, %c0_42] : memref<1x32xf32, #tpu.memory_space<vmem>>, vector<1x32xf32>
    %64 = vector.broadcast %63 : vector<1x32xf32> to vector<128x32xf32>
    %65 = arith.addf %62, %64 : vector<128x32xf32>
    %cst_43 = arith.constant 0.000000e+00 : f32
    %66 = vector.broadcast %cst_43 : f32 to vector<128x32xf32>
    %67 = arith.maximumf %65, %66 : vector<128x32xf32>
    %68 = arith.truncf %67 : vector<128x32xf32> to vector<128x32xbf16>
    %c0_44 = arith.constant 0 : index
    %c0_45 = arith.constant 0 : index
    %69 = vector.load %arg16[%c0_44, %c0_45] : memref<32x128xbf16, #tpu.memory_space<vmem>>, vector<32x128xbf16>
    %cst_46 = arith.constant dense<0.000000e+00> : vector<128x128xf32>
    %70 = tpu.matmul %68, %69, %cst_46 {dimension_numbers = #tpu.dot_dimension_numbers<[1], [0], [0], [1], [0, 0, 1, 1], [], []>} : vector<128x32xbf16>, vector<32x128xbf16>, vector<128x128xf32> -> vector<128x128xf32>
    %71 = arith.truncf %1 : vector<128x32xf32> to vector<128x32xbf16>
    %c0_47 = arith.constant 0 : index
    %c0_48 = arith.constant 0 : index
    %72 = vector.load %arg17[%c0_47, %c0_48] : memref<32x128xbf16, #tpu.memory_space<vmem>>, vector<32x128xbf16>
    %cst_49 = arith.constant dense<0.000000e+00> : vector<128x128xf32>
    %73 = tpu.matmul %71, %72, %cst_49 {dimension_numbers = #tpu.dot_dimension_numbers<[1], [0], [0], [1], [0, 0, 1, 1], [], []>} : vector<128x32xbf16>, vector<32x128xbf16>, vector<128x128xf32> -> vector<128x128xf32>
    %74 = arith.addf %70, %73 : vector<128x128xf32>
    %c0_50 = arith.constant 0 : index
    %c0_51 = arith.constant 0 : index
    %75 = vector.load %arg18[%c0_50, %c0_51] : memref<1x128xf32, #tpu.memory_space<vmem>>, vector<1x128xf32>
    %76 = vector.broadcast %75 : vector<1x128xf32> to vector<128x128xf32>
    %77 = arith.addf %74, %76 : vector<128x128xf32>
    %cst_52 = arith.constant 0.000000e+00 : f32
    %78 = vector.broadcast %cst_52 : f32 to vector<128x128xf32>
    %79 = arith.maximumf %77, %78 : vector<128x128xf32>
    %c0_53 = arith.constant 0 : index
    %c0_54 = arith.constant 0 : index
    %c0_55 = arith.constant 0 : index
    %80 = vector.load %arg19[%c0_53, %c0_54, %c0_55] : memref<1x128x128xf32, #tpu.memory_space<vmem>>, vector<1x128x128xf32>
    %81 = vector.shape_cast %80 : vector<1x128x128xf32> to vector<128x128xf32>
    %82 = vector.shape_cast %79 : vector<128x128xf32> to vector<1x128x128xf32>
    tpu.vector_store %arg19[%c0_53, %c0_54, %c0_55], %82 {strides = array<i32>} : memref<1x128x128xf32, #tpu.memory_space<vmem>>, vector<1x128x128xf32>,
    return
  }
  func.func @transform_0(%arg0: i32, %arg1: i32) -> (i32, i32, i32) {
    %c0_i32 = arith.constant 0 : i32
    %c0_i32_0 = arith.constant 0 : i32
    return %arg0, %arg1, %c0_i32 : i32, i32, i32
  }
  func.func @transform_1(%arg0: i32, %arg1: i32) -> (i32, i32, i32) {
    %c0_i32 = arith.constant 0 : i32
    %c0_i32_0 = arith.constant 0 : i32
    %c0_i32_1 = arith.constant 0 : i32
    return %arg0, %c0_i32, %c0_i32_0 : i32, i32, i32
  }
  func.func @transform_2(%arg0: i32, %arg1: i32) -> (i32, i32) {
    %c0_i32 = arith.constant 0 : i32
    %c0_i32_0 = arith.constant 0 : i32
    %c0_i32_1 = arith.constant 0 : i32
    return %c0_i32, %c0_i32_0 : i32, i32
  }
  func.func @transform_3(%arg0: i32, %arg1: i32) -> (i32, i32) {
    %c0_i32 = arith.constant 0 : i32
    %c0_i32_0 = arith.constant 0 : i32
    %c0_i32_1 = arith.constant 0 : i32
    return %c0_i32, %c0_i32_0 : i32, i32
  }
  func.func @transform_4(%arg0: i32, %arg1: i32) -> (i32, i32) {
    %c0_i32 = arith.constant 0 : i32
    %c0_i32_0 = arith.constant 0 : i32
    %c0_i32_1 = arith.constant 0 : i32
    return %c0_i32, %c0_i32_0 : i32, i32
  }
  func.func @transform_5(%arg0: i32, %arg1: i32) -> (i32, i32) {
    %c0_i32 = arith.constant 0 : i32
    %c0_i32_0 = arith.constant 0 : i32
    %c0_i32_1 = arith.constant 0 : i32
    return %c0_i32, %c0_i32_0 : i32, i32
  }
  func.func @transform_6(%arg0: i32, %arg1: i32) -> (i32, i32) {
    %c0_i32 = arith.constant 0 : i32
    %c0_i32_0 = arith.constant 0 : i32
    %c0_i32_1 = arith.constant 0 : i32
    return %c0_i32, %c0_i32_0 : i32, i32
  }
  func.func @transform_7(%arg0: i32, %arg1: i32) -> (i32, i32) {
    %c0_i32 = arith.constant 0 : i32
    %c0_i32_0 = arith.constant 0 : i32
    %c0_i32_1 = arith.constant 0 : i32
    return %c0_i32, %c0_i32_0 : i32, i32
  }
  func.func @transform_8(%arg0: i32, %arg1: i32) -> (i32, i32) {
    %c0_i32 = arith.constant 0 : i32
    %c0_i32_0 = arith.constant 0 : i32
    %c0_i32_1 = arith.constant 0 : i32
    return %c0_i32, %c0_i32_0 : i32, i32
  }
  func.func @transform_9(%arg0: i32, %arg1: i32) -> (i32, i32) {
    %c0_i32 = arith.constant 0 : i32
    %c0_i32_0 = arith.constant 0 : i32
    %c0_i32_1 = arith.constant 0 : i32
    return %c0_i32, %c0_i32_0 : i32, i32
  }
  func.func @transform_10(%arg0: i32, %arg1: i32) -> (i32, i32) {
    %c0_i32 = arith.constant 0 : i32
    %c0_i32_0 = arith.constant 0 : i32
    %c0_i32_1 = arith.constant 0 : i32
    return %c0_i32, %c0_i32_0 : i32, i32
  }
  func.func @transform_11(%arg0: i32, %arg1: i32) -> (i32, i32) {
    %c0_i32 = arith.constant 0 : i32
    %c0_i32_0 = arith.constant 0 : i32
    %c0_i32_1 = arith.constant 0 : i32
    return %c0_i32, %c0_i32_0 : i32, i32
  }
  func.func @transform_12(%arg0: i32, %arg1: i32) -> (i32, i32) {
    %c0_i32 = arith.constant 0 : i32
    %c0_i32_0 = arith.constant 0 : i32
    %c0_i32_1 = arith.constant 0 : i32
    return %c0_i32, %c0_i32_0 : i32, i32
  }
  func.func @transform_13(%arg0: i32, %arg1: i32) -> (i32, i32) {
    %c0_i32 = arith.constant 0 : i32
    %c0_i32_0 = arith.constant 0 : i32
    %c0_i32_1 = arith.constant 0 : i32
    return %c0_i32, %c0_i32_0 : i32, i32
  }
  func.func @transform_14(%arg0: i32, %arg1: i32) -> (i32, i32) {
    %c0_i32 = arith.constant 0 : i32
    %c0_i32_0 = arith.constant 0 : i32
    %c0_i32_1 = arith.constant 0 : i32
    return %c0_i32, %c0_i32_0 : i32, i32
  }
  func.func @transform_15(%arg0: i32, %arg1: i32) -> (i32, i32) {
    %c0_i32 = arith.constant 0 : i32
    %c0_i32_0 = arith.constant 0 : i32
    %c0_i32_1 = arith.constant 0 : i32
    return %c0_i32, %c0_i32_0 : i32, i32
  }
  func.func @transform_16(%arg0: i32, %arg1: i32) -> (i32, i32) {
    %c0_i32 = arith.constant 0 : i32
    %c0_i32_0 = arith.constant 0 : i32
    %c0_i32_1 = arith.constant 0 : i32
    return %c0_i32, %c0_i32_0 : i32, i32
  }
  func.func @transform_17(%arg0: i32, %arg1: i32) -> (i32, i32, i32) {
    %c0_i32 = arith.constant 0 : i32
    %c0_i32_0 = arith.constant 0 : i32
    return %arg0, %arg1, %c0_i32 : i32, i32, i32
  }
}

</mosaic_0001>

<llo_original>
// kernel: tpu_custom_call.1
$region0: #{tpu_custom_call.1}
  #allocation0 [shape = 'u32[]', space=smem, size = 0x4, offset = 0x4, fixed_abs, tag = 'smem constant byte address 0x4 - core index']
  #allocation1 [shape = 'u32[144,128]{1,0:T(1,128)}', space=vmem, size = 0x12000, scoped, tag = 'internal scratch']
  %s0 = inlined_call_operand.vmem [shape: f32[2,256,32], index: 0, kind: input, shape index: {}]
  %s1 = inlined_call_operand.vmem [shape: f32[2,8,32], index: 1, kind: input, shape index: {}]
  %s2 = inlined_call_operand.vmem [shape: bf16[32,128], index: 2, kind: input, shape index: {}]
  %s3 = inlined_call_operand.vmem [shape: f32[1,128], index: 3, kind: input, shape index: {}]
  %s4 = inlined_call_operand.vmem [shape: bf16[128,128], index: 4, kind: input, shape index: {}]
  %s5 = inlined_call_operand.vmem [shape: f32[1,128], index: 5, kind: input, shape index: {}]
  %s6 = inlined_call_operand.vmem [shape: bf16[32,128], index: 6, kind: input, shape index: {}]
  %s7 = inlined_call_operand.vmem [shape: f32[1,128], index: 7, kind: input, shape index: {}]
  %s8 = inlined_call_operand.vmem [shape: bf16[128,128], index: 8, kind: input, shape index: {}]
  %s9 = inlined_call_operand.vmem [shape: f32[1,128], index: 9, kind: input, shape index: {}]
  %s10 = inlined_call_operand.vmem [shape: bf16[32,128], index: 10, kind: input, shape index: {}]
  %s11 = inlined_call_operand.vmem [shape: f32[1,128], index: 11, kind: input, shape index: {}]
  %s12 = inlined_call_operand.vmem [shape: bf16[128,32], index: 12, kind: input, shape index: {}]
  %s13 = inlined_call_operand.vmem [shape: f32[1,32], index: 13, kind: input, shape index: {}]
  %s14 = inlined_call_operand.vmem [shape: bf16[32,128], index: 14, kind: input, shape index: {}]
  %s15 = inlined_call_operand.vmem [shape: bf16[32,128], index: 15, kind: input, shape index: {}]
  %s16 = inlined_call_operand.vmem [shape: f32[1,128], index: 16, kind: input, shape index: {}]
  %s17 = inlined_call_operand.hbm [shape: f32[2,256,128], index: 17, kind: output, shape index: {}]
  %s18 = sld [smem:[#allocation0]]
  $region101: #{tpu_custom_call.1} parent=0
    _
  %s20 = ssub.s32 1, %s18
  %s21 = scalar_select 0, %s20, %s18
  $region1: #{tpu_custom_call.1} parent=0
    #allocation2 [shape = 'u8[131072]{0}', space=vmem, size = 0x20000, scoped, tag = 'output window, operand 0']
    #allocation3 [shape = 's32[2]{0}', space=sflag, size = 0x8, scoped, tag = 'scoped memory for tpu_custom_call.1']
    %22 = vsyncpa [#allocation3], 0
    %s23 = scalar_lea.sflag [#allocation3], 1
    %24 = vsyncpa %s23, 0
    loop: start=0, step=1, limit=6
    $region2: #{tpu_custom_call.1} parent=1 // loop_pre_header
      _
    $region3: #{tpu_custom_call.1} parent=1 // loop_header
      %s26 = sphi 0, %s30
      %p27 = scmp.ge.s32.totalorder %s26, 6
      %s33 = sphi 0, %s45
      %s34 = sphi 0, %s41
      %s35 = sphi 0, %s33
      %s36 = sphi 0, %s34
      %s37 = sphi 0, %s35
      %s38 = sphi 0, %s36
      %s50 = sphi 0, %s52
      %s53 = sphi 0, %s50
      %s54 = sphi 0, %s53
      %s70 = sphi 0, %s54
      %s76 = sphi 0, %s78
      %s79 = sphi 0, %s76
      %s80 = sphi 0, %s79
      %s96 = sphi 0, %s80
      %s100 = sphi 0, %s100
      %s102 = sphi 0, %s100
      %s103 = sphi 0, %s102
      %s117 = sphi 0, %s103
      %s121 = sphi 0, %s121
      %s123 = sphi 0, %s121
      %s124 = sphi 0, %s123
      %s138 = sphi 0, %s124
      %s142 = sphi 0, %s142
      %s144 = sphi 0, %s142
      %s145 = sphi 0, %s144
      %s159 = sphi 0, %s145
      %s163 = sphi 0, %s163
      %s165 = sphi 0, %s163
      %s166 = sphi 0, %s165
      %s180 = sphi 0, %s166
      %s184 = sphi 0, %s184
      %s186 = sphi 0, %s184
      %s187 = sphi 0, %s186
      %s201 = sphi 0, %s187
      %s205 = sphi 0, %s205
      %s207 = sphi 0, %s205
      %s208 = sphi 0, %s207
      %s222 = sphi 0, %s208
      %s226 = sphi 0, %s226
      %s228 = sphi 0, %s226
      %s229 = sphi 0, %s228
      %s243 = sphi 0, %s229
      %s247 = sphi 0, %s247
      %s249 = sphi 0, %s247
      %s250 = sphi 0, %s249
      %s264 = sphi 0, %s250
      %s268 = sphi 0, %s268
      %s270 = sphi 0, %s268
      %s271 = sphi 0, %s270
      %s285 = sphi 0, %s271
      %s289 = sphi 0, %s289
      %s291 = sphi 0, %s289
      %s292 = sphi 0, %s291
      %s306 = sphi 0, %s292
      %s310 = sphi 0, %s310
      %s312 = sphi 0, %s310
      %s313 = sphi 0, %s312
      %s327 = sphi 0, %s313
      %s331 = sphi 0, %s331
      %s333 = sphi 0, %s331
      %s334 = sphi 0, %s333
      %s348 = sphi 0, %s334
      %s352 = sphi 0, %s352
      %s354 = sphi 0, %s352
      %s355 = sphi 0, %s354
      %s369 = sphi 0, %s355
      %s373 = sphi 0, %s373
      %s375 = sphi 0, %s373
      %s376 = sphi 0, %s375
      %s390 = sphi 0, %s376
      %s394 = sphi 0, %s394
      %s396 = sphi 0, %s394
      %s397 = sphi 0, %s396
      %s411 = sphi 0, %s397
      %s419 = sphi 0, %s421
      %s422 = sphi 0, %s419
      %s423 = sphi 0, %s422
      %s439 = sphi 0, %s423
    $region4: #{tpu_custom_call.1} parent=1 // loop_header_branch
      %29 = sbr.rel (%p27) target = $region8
    $region5: #{tpu_custom_call.1} parent=1 // loop_body
      %s31 = ssub.s32 %s26, 1
      %s32 = ssub.s32 %s26, 2
      %s39 = sadd.s32 1, %s34
      %p40 = scmp.ge.s32.totalorder %s39, 2
      %s41 = scalar_select %p40, 0, %s39
      %s42 = sadd.s32 1, %s33
      %s43 = scalar_select %p40, %s42, %s33
      %p44 = scmp.ge.s32.totalorder %s43, 2
      %s45 = scalar_select %p44, 0, %s43
      %s46 = ssub.s32 %s33, %s45
      %s47 = ssub.s32 %s34, %s41
      %s48 = sor.u32 %s46, %s47
      %p49 = scmp.eq.s32.totalorder %s48, 0
      %s51 = sadd.s32 %s50, 1
      %s52 = scalar_select %p49, %s50, %s51
      %p55 = pneg %p49
      %p56 = scmp.eq.s32.totalorder %s26, 3
      %p57 = por %p55, %p56
      %p58 = scmp.ne.s32.totalorder %s50, %s53
      %p59 = scmp.eq.s32.totalorder %s26, 0
      %p60 = por %p58, %p59
      %p61 = scmp.ne.s32.totalorder %s50, %s53
      %p62 = scmp.eq.s32.totalorder %s31, 3
      %p63 = por %p61, %p62
      %p64 = scmp.ne.s32.totalorder %s53, %s54
      %p65 = scmp.eq.s32.totalorder %s31, 0
      %p66 = por %p64, %p65
      %p67 = scmp.ne.s32.totalorder %s53, %s54
      %p68 = scmp.eq.s32.totalorder %s32, 3
      %p69 = por %p67, %p68
      %p71 = scmp.ne.s32.totalorder %s54, %s70
      %p72 = scmp.eq.s32.totalorder %s32, 0
      %p73 = por %p71, %p72
      %s74 = ssub.s32 %s33, %s45
      %p75 = scmp.eq.s32.totalorder %s74, 0
      %s77 = sadd.s32 %s76, 1
      %s78 = scalar_select %p75, %s76, %s77
      %p81 = pneg %p75
      %p82 = scmp.eq.s32.totalorder %s26, 3
      %p83 = por %p81, %p82
      %p84 = scmp.ne.s32.totalorder %s76, %s79
      %p85 = scmp.eq.s32.totalorder %s26, 0
      %p86 = por %p84, %p85
      %p87 = scmp.ne.s32.totalorder %s76, %s79
      %p88 = scmp.eq.s32.totalorder %s31, 3
      %p89 = por %p87, %p88
      %p90 = scmp.ne.s32.totalorder %s79, %s80
      %p91 = scmp.eq.s32.totalorder %s31, 0
      %p92 = por %p90, %p91
      %p93 = scmp.ne.s32.totalorder %s79, %s80
      %p94 = scmp.eq.s32.totalorder %s32, 3
      %p95 = por %p93, %p94
      %p97 = scmp.ne.s32.totalorder %s80, %s96
      %p98 = scmp.eq.s32.totalorder %s32, 0
      %p99 = por %p97, %p98
      %s101 = sadd.s32 %s100, 1
      %p104 = scmp.eq.s32.totalorder %s26, 3
      %p105 = scmp.ne.s32.totalorder %s100, %s102
      %p106 = scmp.eq.s32.totalorder %s26, 0
      %p107 = por %p105, %p106
      %p108 = scmp.ne.s32.totalorder %s100, %s102
      %p109 = scmp.eq.s32.totalorder %s31, 3
      %p110 = por %p108, %p109
      %p111 = scmp.ne.s32.totalorder %s102, %s103
      %p112 = scmp.eq.s32.totalorder %s31, 0
      %p113 = por %p111, %p112
      %p114 = scmp.ne.s32.totalorder %s102, %s103
      %p115 = scmp.eq.s32.totalorder %s32, 3
      %p116 = por %p114, %p115
      %p118 = scmp.ne.s32.totalorder %s103, %s117
      %p119 = scmp.eq.s32.totalorder %s32, 0
      %p120 = por %p118, %p119
      %s122 = sadd.s32 %s121, 1
      %p125 = scmp.eq.s32.totalorder %s26, 3
      %p126 = scmp.ne.s32.totalorder %s121, %s123
      %p127 = scmp.eq.s32.totalorder %s26, 0
      %p128 = por %p126, %p127
      %p129 = scmp.ne.s32.totalorder %s121, %s123
      %p130 = scmp.eq.s32.totalorder %s31, 3
      %p131 = por %p129, %p130
      %p132 = scmp.ne.s32.totalorder %s123, %s124
      %p133 = scmp.eq.s32.totalorder %s31, 0
      %p134 = por %p132, %p133
      %p135 = scmp.ne.s32.totalorder %s123, %s124
      %p136 = scmp.eq.s32.totalorder %s32, 3
      %p137 = por %p135, %p136
      %p139 = scmp.ne.s32.totalorder %s124, %s138
      %p140 = scmp.eq.s32.totalorder %s32, 0
      %p141 = por %p139, %p140
      %s143 = sadd.s32 %s142, 1
      %p146 = scmp.eq.s32.totalorder %s26, 3
      %p147 = scmp.ne.s32.totalorder %s142, %s144
      %p148 = scmp.eq.s32.totalorder %s26, 0
      %p149 = por %p147, %p148
      %p150 = scmp.ne.s32.totalorder %s142, %s144
      %p151 = scmp.eq.s32.totalorder %s31, 3
      %p152 = por %p150, %p151
      %p153 = scmp.ne.s32.totalorder %s144, %s145
      %p154 = scmp.eq.s32.totalorder %s31, 0
      %p155 = por %p153, %p154
      %p156 = scmp.ne.s32.totalorder %s144, %s145
      %p157 = scmp.eq.s32.totalorder %s32, 3
      %p158 = por %p156, %p157
      %p160 = scmp.ne.s32.totalorder %s145, %s159
      %p161 = scmp.eq.s32.totalorder %s32, 0
      %p162 = por %p160, %p161
      %s164 = sadd.s32 %s163, 1
      %p167 = scmp.eq.s32.totalorder %s26, 3
      %p168 = scmp.ne.s32.totalorder %s163, %s165
      %p169 = scmp.eq.s32.totalorder %s26, 0
      %p170 = por %p168, %p169
      %p171 = scmp.ne.s32.totalorder %s163, %s165
      %p172 = scmp.eq.s32.totalorder %s31, 3
      %p173 = por %p171, %p172
      %p174 = scmp.ne.s32.totalorder %s165, %s166
      %p175 = scmp.eq.s32.totalorder %s31, 0
      %p176 = por %p174, %p175
      %p177 = scmp.ne.s32.totalorder %s165, %s166
      %p178 = scmp.eq.s32.totalorder %s32, 3
      %p179 = por %p177, %p178
      %p181 = scmp.ne.s32.totalorder %s166, %s180
      %p182 = scmp.eq.s32.totalorder %s32, 0
      %p183 = por %p181, %p182
      %s185 = sadd.s32 %s184, 1
      %p188 = scmp.eq.s32.totalorder %s26, 3
      %p189 = scmp.ne.s32.totalorder %s184, %s186
      %p190 = scmp.eq.s32.totalorder %s26, 0
      %p191 = por %p189, %p190
      %p192 = scmp.ne.s32.totalorder %s184, %s186
      %p193 = scmp.eq.s32.totalorder %s31, 3
      %p194 = por %p192, %p193
      %p195 = scmp.ne.s32.totalorder %s186, %s187
      %p196 = scmp.eq.s32.totalorder %s31, 0
      %p197 = por %p195, %p196
      %p198 = scmp.ne.s32.totalorder %s186, %s187
      %p199 = scmp.eq.s32.totalorder %s32, 3
      %p200 = por %p198, %p199
      %p202 = scmp.ne.s32.totalorder %s187, %s201
      %p203 = scmp.eq.s32.totalorder %s32, 0
      %p204 = por %p202, %p203
      %s206 = sadd.s32 %s205, 1
      %p209 = scmp.eq.s32.totalorder %s26, 3
      %p210 = scmp.ne.s32.totalorder %s205, %s207
      %p211 = scmp.eq.s32.totalorder %s26, 0
      %p212 = por %p210, %p211
      %p213 = scmp.ne.s32.totalorder %s205, %s207
      %p214 = scmp.eq.s32.totalorder %s31, 3
      %p215 = por %p213, %p214
      %p216 = scmp.ne.s32.totalorder %s207, %s208
      %p217 = scmp.eq.s32.totalorder %s31, 0
      %p218 = por %p216, %p217
      %p219 = scmp.ne.s32.totalorder %s207, %s208
      %p220 = scmp.eq.s32.totalorder %s32, 3
      %p221 = por %p219, %p220
      %p223 = scmp.ne.s32.totalorder %s208, %s222
      %p224 = scmp.eq.s32.totalorder %s32, 0
      %p225 = por %p223, %p224
      %s227 = sadd.s32 %s226, 1
      %p230 = scmp.eq.s32.totalorder %s26, 3
      %p231 = scmp.ne.s32.totalorder %s226, %s228
      %p232 = scmp.eq.s32.totalorder %s26, 0
      %p233 = por %p231, %p232
      %p234 = scmp.ne.s32.totalorder %s226, %s228
      %p235 = scmp.eq.s32.totalorder %s31, 3
      %p236 = por %p234, %p235
      %p237 = scmp.ne.s32.totalorder %s228, %s229
      %p238 = scmp.eq.s32.totalorder %s31, 0
      %p239 = por %p237, %p238
      %p240 = scmp.ne.s32.totalorder %s228, %s229
      %p241 = scmp.eq.s32.totalorder %s32, 3
      %p242 = por %p240, %p241
      %p244 = scmp.ne.s32.totalorder %s229, %s243
      %p245 = scmp.eq.s32.totalorder %s32, 0
      %p246 = por %p244, %p245
      %s248 = sadd.s32 %s247, 1
      %p251 = scmp.eq.s32.totalorder %s26, 3
      %p252 = scmp.ne.s32.totalorder %s247, %s249
      %p253 = scmp.eq.s32.totalorder %s26, 0
      %p254 = por %p252, %p253
      %p255 = scmp.ne.s32.totalorder %s247, %s249
      %p256 = scmp.eq.s32.totalorder %s31, 3
      %p257 = por %p255, %p256
      %p258 = scmp.ne.s32.totalorder %s249, %s250
      %p259 = scmp.eq.s32.totalorder %s31, 0
      %p260 = por %p258, %p259
      %p261 = scmp.ne.s32.totalorder %s249, %s250
      %p262 = scmp.eq.s32.totalorder %s32, 3
      %p263 = por %p261, %p262
      %p265 = scmp.ne.s32.totalorder %s250, %s264
      %p266 = scmp.eq.s32.totalorder %s32, 0
      %p267 = por %p265, %p266
      %s269 = sadd.s32 %s268, 1
      %p272 = scmp.eq.s32.totalorder %s26, 3
      %p273 = scmp.ne.s32.totalorder %s268, %s270
      %p274 = scmp.eq.s32.totalorder %s26, 0
      %p275 = por %p273, %p274
      %p276 = scmp.ne.s32.totalorder %s268, %s270
      %p277 = scmp.eq.s32.totalorder %s31, 3
      %p278 = por %p276, %p277
      %p279 = scmp.ne.s32.totalorder %s270, %s271
      %p280 = scmp.eq.s32.totalorder %s31, 0
      %p281 = por %p279, %p280
      %p282 = scmp.ne.s32.totalorder %s270, %s271
      %p283 = scmp.eq.s32.totalorder %s32, 3
      %p284 = por %p282, %p283
      %p286 = scmp.ne.s32.totalorder %s271, %s285
      %p287 = scmp.eq.s32.totalorder %s32, 0
      %p288 = por %p286, %p287
      %s290 = sadd.s32 %s289, 1
      %p293 = scmp.eq.s32.totalorder %s26, 3
      %p294 = scmp.ne.s32.totalorder %s289, %s291
      %p295 = scmp.eq.s32.totalorder %s26, 0
      %p296 = por %p294, %p295
      %p297 = scmp.ne.s32.totalorder %s289, %s291
      %p298 = scmp.eq.s32.totalorder %s31, 3
      %p299 = por %p297, %p298
      %p300 = scmp.ne.s32.totalorder %s291, %s292
      %p301 = scmp.eq.s32.totalorder %s31, 0
      %p302 = por %p300, %p301
      %p303 = scmp.ne.s32.totalorder %s291, %s292
      %p304 = scmp.eq.s32.totalorder %s32, 3
      %p305 = por %p303, %p304
      %p307 = scmp.ne.s32.totalorder %s292, %s306
      %p308 = scmp.eq.s32.totalorder %s32, 0
      %p309 = por %p307, %p308
      %s311 = sadd.s32 %s310, 1
      %p314 = scmp.eq.s32.totalorder %s26, 3
      %p315 = scmp.ne.s32.totalorder %s310, %s312
      %p316 = scmp.eq.s32.totalorder %s26, 0
      %p317 = por %p315, %p316
      %p318 = scmp.ne.s32.totalorder %s310, %s312
      %p319 = scmp.eq.s32.totalorder %s31, 3
      %p320 = por %p318, %p319
      %p321 = scmp.ne.s32.totalorder %s312, %s313
      %p322 = scmp.eq.s32.totalorder %s31, 0
      %p323 = por %p321, %p322
      %p324 = scmp.ne.s32.totalorder %s312, %s313
      %p325 = scmp.eq.s32.totalorder %s32, 3
      %p326 = por %p324, %p325
      %p328 = scmp.ne.s32.totalorder %s313, %s327
      %p329 = scmp.eq.s32.totalorder %s32, 0
      %p330 = por %p328, %p329
      %s332 = sadd.s32 %s331, 1
      %p335 = scmp.eq.s32.totalorder %s26, 3
      %p336 = scmp.ne.s32.totalorder %s331, %s333
      %p337 = scmp.eq.s32.totalorder %s26, 0
      %p338 = por %p336, %p337
      %p339 = scmp.ne.s32.totalorder %s331, %s333
      %p340 = scmp.eq.s32.totalorder %s31, 3
      %p341 = por %p339, %p340
      %p342 = scmp.ne.s32.totalorder %s333, %s334
      %p343 = scmp.eq.s32.totalorder %s31, 0
      %p344 = por %p342, %p343
      %p345 = scmp.ne.s32.totalorder %s333, %s334
      %p346 = scmp.eq.s32.totalorder %s32, 3
      %p347 = por %p345, %p346
      %p349 = scmp.ne.s32.totalorder %s334, %s348
      %p350 = scmp.eq.s32.totalorder %s32, 0
      %p351 = por %p349, %p350
      %s353 = sadd.s32 %s352, 1
      %p356 = scmp.eq.s32.totalorder %s26, 3
      %p357 = scmp.ne.s32.totalorder %s352, %s354
      %p358 = scmp.eq.s32.totalorder %s26, 0
      %p359 = por %p357, %p358
      %p360 = scmp.ne.s32.totalorder %s352, %s354
      %p361 = scmp.eq.s32.totalorder %s31, 3
      %p362 = por %p360, %p361
      %p363 = scmp.ne.s32.totalorder %s354, %s355
      %p364 = scmp.eq.s32.totalorder %s31, 0
      %p365 = por %p363, %p364
      %p366 = scmp.ne.s32.totalorder %s354, %s355
      %p367 = scmp.eq.s32.totalorder %s32, 3
      %p368 = por %p366, %p367
      %p370 = scmp.ne.s32.totalorder %s355, %s369
      %p371 = scmp.eq.s32.totalorder %s32, 0
      %p372 = por %p370, %p371
      %s374 = sadd.s32 %s373, 1
      %p377 = scmp.eq.s32.totalorder %s26, 3
      %p378 = scmp.ne.s32.totalorder %s373, %s375
      %p379 = scmp.eq.s32.totalorder %s26, 0
      %p380 = por %p378, %p379
      %p381 = scmp.ne.s32.totalorder %s373, %s375
      %p382 = scmp.eq.s32.totalorder %s31, 3
      %p383 = por %p381, %p382
      %p384 = scmp.ne.s32.totalorder %s375, %s376
      %p385 = scmp.eq.s32.totalorder %s31, 0
      %p386 = por %p384, %p385
      %p387 = scmp.ne.s32.totalorder %s375, %s376
      %p388 = scmp.eq.s32.totalorder %s32, 3
      %p389 = por %p387, %p388
      %p391 = scmp.ne.s32.totalorder %s376, %s390
      %p392 = scmp.eq.s32.totalorder %s32, 0
      %p393 = por %p391, %p392
      %s395 = sadd.s32 %s394, 1
      %p398 = scmp.eq.s32.totalorder %s26, 3
      %p399 = scmp.ne.s32.totalorder %s394, %s396
      %p400 = scmp.eq.s32.totalorder %s26, 0
      %p401 = por %p399, %p400
      %p402 = scmp.ne.s32.totalorder %s394, %s396
      %p403 = scmp.eq.s32.totalorder %s31, 3
      %p404 = por %p402, %p403
      %p405 = scmp.ne.s32.totalorder %s396, %s397
      %p406 = scmp.eq.s32.totalorder %s31, 0
      %p407 = por %p405, %p406
      %p408 = scmp.ne.s32.totalorder %s396, %s397
      %p409 = scmp.eq.s32.totalorder %s32, 3
      %p410 = por %p408, %p409
      %p412 = scmp.ne.s32.totalorder %s397, %s411
      %p413 = scmp.eq.s32.totalorder %s32, 0
      %p414 = por %p412, %p413
      %s415 = ssub.s32 %s33, %s45
      %s416 = ssub.s32 %s34, %s41
      %s417 = sor.u32 %s415, %s416
      %p418 = scmp.eq.s32.totalorder %s417, 0
      %s420 = sadd.s32 %s419, 1
      %s421 = scalar_select %p418, %s419, %s420
      %p424 = pneg %p418
      %p425 = scmp.eq.s32.totalorder %s26, 3
      %p426 = por %p424, %p425
      %p427 = scmp.ne.s32.totalorder %s419, %s422
      %p428 = scmp.eq.s32.totalorder %s26, 0
      %p429 = por %p427, %p428
      %p430 = scmp.ne.s32.totalorder %s419, %s422
      %p431 = scmp.eq.s32.totalorder %s31, 3
      %p432 = por %p430, %p431
      %p433 = scmp.ne.s32.totalorder %s422, %s423
      %p434 = scmp.eq.s32.totalorder %s31, 0
      %p435 = por %p433, %p434
      %p436 = scmp.ne.s32.totalorder %s422, %s423
      %p437 = scmp.eq.s32.totalorder %s32, 3
      %p438 = por %p436, %p437
      %p440 = scmp.ne.s32.totalorder %s423, %s439
      %p441 = scmp.eq.s32.totalorder %s32, 0
      %p442 = por %p440, %p441
      %p443 = scmp.le.s32.totalorder 1, %s26
      %p444 = scmp.lt.s32.totalorder %s26, 5
      %p445 = pnand %p443, %p444
      %p446 = pneg %p445
      // Predicated region
      $region9: #{tpu_custom_call.1} parent=5 // pred_check
        _
      $region10: #{tpu_custom_call.1} parent=5 // pred_check_branch
        %448 = sbr.rel (%p445) target = $region12
      $region11: #{tpu_custom_call.1} parent=5 // pred_region
        %s449 = ssub.s32 %s26, 1
        // Predicated region
        $region13: #{tpu_custom_call.1} parent=11 // pred_check
          %p450 = pneg %p113
        $region14: #{tpu_custom_call.1} parent=11 // pred_check_branch
          %452 = sbr.rel (%p450) target = $region16
        $region15: #{tpu_custom_call.1} parent=11 // pred_region
          _
        $region16: #{tpu_custom_call.1} parent=11 // pred_fallthru
          _
        // Predicated region
        $region17: #{tpu_custom_call.1} parent=11 // pred_check
          %p453 = pneg %p134
        $region18: #{tpu_custom_call.1} parent=11 // pred_check_branch
          %455 = sbr.rel (%p453) target = $region20
        $region19: #{tpu_custom_call.1} parent=11 // pred_region
          _
        $region20: #{tpu_custom_call.1} parent=11 // pred_fallthru
          _
        // Predicated region
        $region21: #{tpu_custom_call.1} parent=11 // pred_check
          %p456 = pneg %p155
        $region22: #{tpu_custom_call.1} parent=11 // pred_check_branch
          %458 = sbr.rel (%p456) target = $region24
        $region23: #{tpu_custom_call.1} parent=11 // pred_region
          _
        $region24: #{tpu_custom_call.1} parent=11 // pred_fallthru
          _
        // Predicated region
        $region25: #{tpu_custom_call.1} parent=11 // pred_check
          %p459 = pneg %p176
        $region26: #{tpu_custom_call.1} parent=11 // pred_check_branch
          %461 = sbr.rel (%p459) target = $region28
        $region27: #{tpu_custom_call.1} parent=11 // pred_region
          _
        $region28: #{tpu_custom_call.1} parent=11 // pred_fallthru
          _
        // Predicated region
        $region29: #{tpu_custom_call.1} parent=11 // pred_check
          %p462 = pneg %p197
        $region30: #{tpu_custom_call.1} parent=11 // pred_check_branch
          %464 = sbr.rel (%p462) target = $region32
        $region31: #{tpu_custom_call.1} parent=11 // pred_region
          _
        $region32: #{tpu_custom_call.1} parent=11 // pred_fallthru
          _
        // Predicated region
        $region33: #{tpu_custom_call.1} parent=11 // pred_check
          %p465 = pneg %p218
        $region34: #{tpu_custom_call.1} parent=11 // pred_check_branch
          %467 = sbr.rel (%p465) target = $region36
        $region35: #{tpu_custom_call.1} parent=11 // pred_region
          _
        $region36: #{tpu_custom_call.1} parent=11 // pred_fallthru
          _
        // Predicated region
        $region37: #{tpu_custom_call.1} parent=11 // pred_check
          %p468 = pneg %p239
        $region38: #{tpu_custom_call.1} parent=11 // pred_check_branch
          %470 = sbr.rel (%p468) target = $region40
        $region39: #{tpu_custom_call.1} parent=11 // pred_region
          _
        $region40: #{tpu_custom_call.1} parent=11 // pred_fallthru
          _
        // Predicated region
        $region41: #{tpu_custom_call.1} parent=11 // pred_check
          %p471 = pneg %p260
        $region42: #{tpu_custom_call.1} parent=11 // pred_check_branch
          %473 = sbr.rel (%p471) target = $region44
        $region43: #{tpu_custom_call.1} parent=11 // pred_region
          _
        $region44: #{tpu_custom_call.1} parent=11 // pred_fallthru
          _
        // Predicated region
        $region45: #{tpu_custom_call.1} parent=11 // pred_check
          %p474 = pneg %p281
        $region46: #{tpu_custom_call.1} parent=11 // pred_check_branch
          %476 = sbr.rel (%p474) target = $region48
        $region47: #{tpu_custom_call.1} parent=11 // pred_region
          _
        $region48: #{tpu_custom_call.1} parent=11 // pred_fallthru
          _
        // Predicated region
        $region49: #{tpu_custom_call.1} parent=11 // pred_check
          %p477 = pneg %p302
        $region50: #{tpu_custom_call.1} parent=11 // pred_check_branch
          %479 = sbr.rel (%p477) target = $region52
        $region51: #{tpu_custom_call.1} parent=11 // pred_region
          _
        $region52: #{tpu_custom_call.1} parent=11 // pred_fallthru
          _
        // Predicated region
        $region53: #{tpu_custom_call.1} parent=11 // pred_check
          %p480 = pneg %p323
        $region54: #{tpu_custom_call.1} parent=11 // pred_check_branch
          %482 = sbr.rel (%p480) target = $region56
        $region55: #{tpu_custom_call.1} parent=11 // pred_region
          _
        $region56: #{tpu_custom_call.1} parent=11 // pred_fallthru
          _
        // Predicated region
        $region57: #{tpu_custom_call.1} parent=11 // pred_check
          %p483 = pneg %p344
        $region58: #{tpu_custom_call.1} parent=11 // pred_check_branch
          %485 = sbr.rel (%p483) target = $region60
        $region59: #{tpu_custom_call.1} parent=11 // pred_region
          _
        $region60: #{tpu_custom_call.1} parent=11 // pred_fallthru
          _
        // Predicated region
        $region61: #{tpu_custom_call.1} parent=11 // pred_check
          %p486 = pneg %p365
        $region62: #{tpu_custom_call.1} parent=11 // pred_check_branch
          %488 = sbr.rel (%p486) target = $region64
        $region63: #{tpu_custom_call.1} parent=11 // pred_region
          _
        $region64: #{tpu_custom_call.1} parent=11 // pred_fallthru
          _
        // Predicated region
        $region65: #{tpu_custom_call.1} parent=11 // pred_check
          %p489 = pneg %p386
        $region66: #{tpu_custom_call.1} parent=11 // pred_check_branch
          %491 = sbr.rel (%p489) target = $region68
        $region67: #{tpu_custom_call.1} parent=11 // pred_region
          _
        $region68: #{tpu_custom_call.1} parent=11 // pred_fallthru
          _
        // Predicated region
        $region69: #{tpu_custom_call.1} parent=11 // pred_check
          %p492 = pneg %p407
        $region70: #{tpu_custom_call.1} parent=11 // pred_check_branch
          %494 = sbr.rel (%p492) target = $region72
        $region71: #{tpu_custom_call.1} parent=11 // pred_region
          _
        $region72: #{tpu_custom_call.1} parent=11 // pred_fallthru
          _
      $region12: #{tpu_custom_call.1} parent=5 // pred_fallthru
        _
      %p495 = scmp.lt.s32.totalorder %s26, 4
      // Predicated region
      $region73: #{tpu_custom_call.1} parent=5 // pred_check
        %p496 = pneg %p495
      $region74: #{tpu_custom_call.1} parent=5 // pred_check_branch
        %498 = sbr.rel (%p496) target = $region76
      $region75: #{tpu_custom_call.1} parent=5 // pred_region
        // Predicated region
        $region77: #{tpu_custom_call.1} parent=75 // pred_check
          %p499 = pneg %p60
        $region78: #{tpu_custom_call.1} parent=75 // pred_check_branch
          %501 = sbr.rel (%p499) target = $region80
        $region79: #{tpu_custom_call.1} parent=75 // pred_region
          %s502 = smul.u32 16, %s34
          %p503 = scmp.lt.s32.totalorder %s33, 1
          %s504 = scalar_select %p503, %s33, 1
          %p505 = scmp.lt.s32.totalorder %s502, 31
          %s506 = scalar_select %p505, %s502, 31
          %s507 = smul.addr %s504, 32
          %s508 = sadd.s32 %s506, %s507
          %s509 = smul.addr %s508, 8
          %s510 = scalar_lea.vmem %s0, %s509
          %s511 = smul.u32 16, %s34
        $region80: #{tpu_custom_call.1} parent=75 // pred_fallthru
          _
        // Predicated region
        $region81: #{tpu_custom_call.1} parent=75 // pred_check
          %p512 = pneg %p86
        $region82: #{tpu_custom_call.1} parent=75 // pred_check_branch
          %514 = sbr.rel (%p512) target = $region84
        $region83: #{tpu_custom_call.1} parent=75 // pred_region
          %p515 = scmp.lt.s32.totalorder %s33, 1
          %s516 = scalar_select %p515, %s33, 1
          %s517 = smul.addr %s516, 8
          %s518 = scalar_lea.vmem %s1, %s517
        $region84: #{tpu_custom_call.1} parent=75 // pred_fallthru
          _
      $region76: #{tpu_custom_call.1} parent=5 // pred_fallthru
        _
      %p519 = scmp.le.s32.totalorder 1, %s26
      %p520 = scmp.lt.s32.totalorder %s26, 5
      %p521 = pnand %p519, %p520
      %p522 = pneg %p521
      // Predicated region
      $region85: #{tpu_custom_call.1} parent=5 // pred_check
        _
      $region86: #{tpu_custom_call.1} parent=5 // pred_check_branch
        %524 = sbr.rel (%p521) target = $region88
      $region87: #{tpu_custom_call.1} parent=5 // pred_region
        %s525 = ssub.s32 %s26, 1
        %s526 = smul.u32 16, %s36
        %p527 = scmp.lt.s32.totalorder %s35, 1
        %s528 = scalar_select %p527, %s35, 1
        %p529 = scmp.lt.s32.totalorder %s526, 31
        %s530 = scalar_select %p529, %s526, 31
        %s531 = smul.addr %s528, 32
        %s532 = sadd.s32 %s530, %s531
        %s533 = smul.addr %s532, 8
        %s534 = scalar_lea.vmem %s0, %s533
        %p535 = pneg %p66
        %p536 = pneg %p63
        %p537 = scmp.lt.s32.totalorder %s35, 1
        %s538 = scalar_select %p537, %s35, 1
        %s539 = smul.addr %s538, 8
        %s540 = scalar_lea.vmem %s1, %s539
        %p541 = pneg %p92
        %p542 = pneg %p89
        %p543 = pneg %p113
        %p544 = pneg %p110
        %p545 = pneg %p134
        %p546 = pneg %p131
        %p547 = pneg %p155
        %p548 = pneg %p152
        %p549 = pneg %p176
        %p550 = pneg %p173
        %p551 = pneg %p197
        %p552 = pneg %p194
        %p553 = pneg %p218
        %p554 = pneg %p215
        %p555 = pneg %p239
        %p556 = pneg %p236
        %p557 = pneg %p260
        %p558 = pneg %p257
        %p559 = pneg %p281
        %p560 = pneg %p278
        %p561 = pneg %p302
        %p562 = pneg %p299
        %p563 = pneg %p323
        %p564 = pneg %p320
        %p565 = pneg %p344
        %p566 = pneg %p341
        %p567 = pneg %p365
        %p568 = pneg %p362
        %p569 = pneg %p386
        %p570 = pneg %p383
        %p571 = pneg %p407
        %p572 = pneg %p404
        %p573 = pneg %p435
        %p574 = pneg %p432
        %s575 = sand.u32 %s422, 1
        %s576 = scalar_lea.sflag [#allocation3], %s575
        %s577 = sand.u32 %s422, 1
        %s578 = smul.addr %s577, 128
        %s579 = scalar_lea.vmem [#allocation2], %s578
        %s580 = smul.u32 16, %s36
        %p581 = scmp.lt.s32.totalorder %s35, 1
        %s582 = scalar_select %p581, %s35, 1
        %p583 = scmp.lt.s32.totalorder %s580, 31
        %s584 = scalar_select %p583, %s580, 31
        %s585 = smul.addr %s582, 32
        %s586 = sadd.s32 %s584, %s585
        %s587 = smul.addr %s586, 8
        %s588 = scalar_lea.vmem %s0, %s587
        %s589 = smul.u32 16, %s36
        %p590 = scmp.lt.s32.totalorder %s35, 1
        %s591 = scalar_select %p590, %s35, 1
        %s592 = smul.addr %s591, 8
        %s593 = scalar_lea.vmem %s1, %s592
        %s594 = smul.u32 16, %s36
        %v596 = vld [vmem:[%s588] sm:$0xff]
        %v597 = vld [vmem:[%s588 + $0x8] sm:$0xff]
        %v598 = vld [vmem:[%s588 + $0x10] sm:$0xff]
        %v599 = vld [vmem:[%s588 + $0x18] sm:$0xff]
        %v600 = vld [vmem:[%s588 + $0x20] sm:$0xff]
        %v601 = vld [vmem:[%s588 + $0x28] sm:$0xff]
        %v602 = vld [vmem:[%s588 + $0x30] sm:$0xff]
        %v603 = vld [vmem:[%s588 + $0x38] sm:$0xff]
        %v604 = vld [vmem:[%s588 + $0x40] sm:$0xff]
        %v605 = vld [vmem:[%s588 + $0x48] sm:$0xff]
        %v606 = vld [vmem:[%s588 + $0x50] sm:$0xff]
        %v607 = vld [vmem:[%s588 + $0x58] sm:$0xff]
        %v608 = vld [vmem:[%s588 + $0x60] sm:$0xff]
        %v609 = vld [vmem:[%s588 + $0x68] sm:$0xff]
        %v610 = vld [vmem:[%s588 + $0x70] sm:$0xff]
        %v611 = vld [vmem:[%s588 + $0x78] sm:$0xff]
        %v612 = vld [vmem:[%s593] sm:$0xff]
        %v613 = vpack.c.bf16 %v597, %v596
        %v614 = vpack.c.bf16 %v599, %v598
        %v615 = vpack.c.bf16 %v601, %v600
        %v616 = vpack.c.bf16 %v603, %v602
        %v617 = vpack.c.bf16 %v605, %v604
        %v618 = vpack.c.bf16 %v607, %v606
        %v619 = vpack.c.bf16 %v609, %v608
        %v620 = vpack.c.bf16 %v611, %v610
        %v621 = vld [vmem:[%s2] sm:$0xf]
        %v622 = vld [vmem:[%s2 + $0x4] sm:$0xf]
        %v623 = vld [vmem:[%s2 + $0x8] sm:$0xf]
        %v624 = vld [vmem:[%s2 + $0xc] sm:$0xf]
        %v625 = vld [vmem:[%s3] sm:$0x1]
        %v627 = vlaneseq
        %v628 = vshrl.u32 %v627, 7
        %v629 = vsub.s32 0, %v628
        %v630 = vrot.slane %v625, %v629
        %v636 = vunpack.c.l.b16 %v621
        %v637 = vunpack.c.l.b16 %v622
        %v638 = vunpack.c.l.b16 %v623
        %v639 = vunpack.c.l.b16 %v624
        %v640 = vpack.c.b16 %v637, %v636
        %v641 = vpack.c.b16 %v639, %v638
        %vm644 = vcmask 261120
        %v646 = vsel %vm644, %v613, 0
        %v649 = vsel %vm644, %v614, 0
        %v652 = vsel %vm644, %v615, 0
        %v655 = vsel %vm644, %v616, 0
        %v658 = vsel %vm644, %v617, 0
        %v661 = vsel %vm644, %v618, 0
        %v664 = vsel %vm644, %v619, 0
        %v667 = vsel %vm644, %v620, 0
        %669 = vmatprep.subr.bf16.mxu0 0
        %670 = vmatpush1.bf16.msra.mxu0 %v640
        %671 = vmatprep.subr.bf16.mxu0 0
        %672 = vmatpush1.bf16.msra.mxu0 %v641
        %673 = vmatprep.subr.bf16.mxu0 0
        %674 = vmatpush1.bf16.msra.mxu0 0
        %675 = vmatprep.subr.bf16.mxu0 0
        %676 = vmatpush1.bf16.msra.mxu0 0
        %677 = vmatprep.subr.bf16.mxu0 0
        %678 = vmatpush1.bf16.msra.mxu0 0
        %679 = vmatprep.subr.bf16.mxu0 0
        %680 = vmatpush1.bf16.msra.mxu0 0
        %681 = vmatprep.subr.bf16.mxu0 0
        %682 = vmatpush1.bf16.msra.mxu0 0
        %683 = vmatprep.subr.bf16.mxu0 0
        %684 = vmatpush1.bf16.msra.mxu0 0
        %685 = vmatprep.subr.bf16.mxu0 0
        %686 = vmatpush1.bf16.msra.mxu0 0
        %687 = vmatprep.subr.bf16.mxu0 0
        %688 = vmatpush1.bf16.msra.mxu0 0
        %689 = vmatprep.subr.bf16.mxu0 0
        %690 = vmatpush1.bf16.msra.mxu0 0
        %691 = vmatprep.subr.bf16.mxu0 0
        %692 = vmatpush1.bf16.msra.mxu0 0
        %693 = vmatprep.subr.bf16.mxu0 0
        %694 = vmatpush1.bf16.msra.mxu0 0
        %695 = vmatprep.subr.bf16.mxu0 0
        %696 = vmatpush1.bf16.msra.mxu0 0
        %697 = vmatprep.subr.bf16.mxu0 0
        %698 = vmatpush1.bf16.msra.mxu0 0
        %699 = vmatprep.subr.bf16.mxu0 0
        %700 = vmatpush1.bf16.msra.mxu0 0
        %701 = vmatprep.mubr.bf16.mxu0 0
        %702 = vmatmul.mubr.bf16.gmra.mrb[0].mxu0 %v646
        %v703 = vpop.f32.mrb[0].mxu0
        %v704 = vadd.f32 %v630, %v703
        %v705 = vpop.f32.mrb[0].mxu0
        %v706 = vpop.f32.mrb[0].mxu0
        %v707 = vadd.f32 %v630, %v706
        %v708 = vpop.f32.mrb[0].mxu0
        %709 = vmatprep.mubr.bf16.mxu0 0
        %710 = vmatmul.mubr.bf16.gmra.mrb[0].mxu0 %v649
        %v711 = vpop.f32.mrb[0].mxu0
        %v712 = vadd.f32 %v630, %v711
        %v713 = vpop.f32.mrb[0].mxu0
        %v714 = vpop.f32.mrb[0].mxu0
        %v715 = vadd.f32 %v630, %v714
        %v716 = vpop.f32.mrb[0].mxu0
        %717 = vmatprep.mubr.bf16.mxu0 0
        %718 = vmatmul.mubr.bf16.gmra.mrb[0].mxu0 %v652
        %v719 = vpop.f32.mrb[0].mxu0
        %v720 = vadd.f32 %v630, %v719
        %v721 = vpop.f32.mrb[0].mxu0
        %v722 = vpop.f32.mrb[0].mxu0
        %v723 = vadd.f32 %v630, %v722
        %v724 = vpop.f32.mrb[0].mxu0
        %725 = vmatprep.mubr.bf16.mxu0 0
        %726 = vmatmul.mubr.bf16.gmra.mrb[0].mxu0 %v655
        %v727 = vpop.f32.mrb[0].mxu0
        %v728 = vadd.f32 %v630, %v727
        %v729 = vpop.f32.mrb[0].mxu0
        %v730 = vpop.f32.mrb[0].mxu0
        %v731 = vadd.f32 %v630, %v730
        %v732 = vpop.f32.mrb[0].mxu0
        %733 = vmatprep.mubr.bf16.mxu0 0
        %734 = vmatmul.mubr.bf16.gmra.mrb[0].mxu0 %v658
        %v735 = vpop.f32.mrb[0].mxu0
        %v736 = vadd.f32 %v630, %v735
        %v737 = vpop.f32.mrb[0].mxu0
        %v738 = vpop.f32.mrb[0].mxu0
        %v739 = vadd.f32 %v630, %v738
        %v740 = vpop.f32.mrb[0].mxu0
        %741 = vmatprep.mubr.bf16.mxu0 0
        %742 = vmatmul.mubr.bf16.gmra.mrb[0].mxu0 %v661
        %v743 = vpop.f32.mrb[0].mxu0
        %v744 = vadd.f32 %v630, %v743
        %v745 = vpop.f32.mrb[0].mxu0
        %v746 = vpop.f32.mrb[0].mxu0
        %v747 = vadd.f32 %v630, %v746
        %v748 = vpop.f32.mrb[0].mxu0
        %749 = vmatprep.mubr.bf16.mxu0 0
        %750 = vmatmul.mubr.bf16.gmra.mrb[0].mxu0 %v664
        %v751 = vpop.f32.mrb[0].mxu0
        %v752 = vadd.f32 %v630, %v751
        %v753 = vpop.f32.mrb[0].mxu0
        %v754 = vpop.f32.mrb[0].mxu0
        %v755 = vadd.f32 %v630, %v754
        %v756 = vpop.f32.mrb[0].mxu0
        %757 = vmatprep.mubr.bf16.mxu0 0
        %758 = vmatmul.mubr.bf16.gmra.mrb[0].mxu0 %v667
        %v759 = vpop.f32.mrb[0].mxu0
        %v760 = vadd.f32 %v630, %v759
        %v761 = vpop.f32.mrb[0].mxu0
        %v762 = vpop.f32.mrb[0].mxu0
        %v763 = vadd.f32 %v630, %v762
        %v764 = vpop.f32.mrb[0].mxu0
        %765 = vdwg.mxu0
        %v766 = vmax.f32 %v704, 0.0
        %v767 = vmax.f32 %v707, 0.0
        %v768 = vmax.f32 %v712, 0.0
        %v769 = vmax.f32 %v715, 0.0
        %v770 = vmax.f32 %v720, 0.0
        %v771 = vmax.f32 %v723, 0.0
        %v772 = vmax.f32 %v728, 0.0
        %v773 = vmax.f32 %v731, 0.0
        %v774 = vmax.f32 %v736, 0.0
        %v775 = vmax.f32 %v739, 0.0
        %v776 = vmax.f32 %v744, 0.0
        %v777 = vmax.f32 %v747, 0.0
        %v778 = vmax.f32 %v752, 0.0
        %v779 = vmax.f32 %v755, 0.0
        %v780 = vmax.f32 %v760, 0.0
        %v781 = vmax.f32 %v763, 0.0
        %v782 = vpack.c.bf16 %v767, %v766
        %v783 = vpack.c.bf16 %v769, %v768
        %v784 = vpack.c.bf16 %v771, %v770
        %v785 = vpack.c.bf16 %v773, %v772
        %v786 = vpack.c.bf16 %v775, %v774
        %v787 = vpack.c.bf16 %v777, %v776
        %v788 = vpack.c.bf16 %v779, %v778
        %v789 = vpack.c.bf16 %v781, %v780
        %v790 = vld [vmem:[%s4] sm:$0xf]
        %v791 = vld [vmem:[%s4 + $0x4] sm:$0xf]
        %v792 = vld [vmem:[%s4 + $0x8] sm:$0xf]
        %v793 = vld [vmem:[%s4 + $0xc] sm:$0xf]
        %v794 = vld [vmem:[%s4 + $0x10] sm:$0xf]
        %v795 = vld [vmem:[%s4 + $0x14] sm:$0xf]
        %v796 = vld [vmem:[%s4 + $0x18] sm:$0xf]
        %v797 = vld [vmem:[%s4 + $0x1c] sm:$0xf]
        %v798 = vld [vmem:[%s4 + $0x20] sm:$0xf]
        %v799 = vld [vmem:[%s4 + $0x24] sm:$0xf]
        %v800 = vld [vmem:[%s4 + $0x28] sm:$0xf]
        %v801 = vld [vmem:[%s4 + $0x2c] sm:$0xf]
        %v802 = vld [vmem:[%s4 + $0x30] sm:$0xf]
        %v803 = vld [vmem:[%s4 + $0x34] sm:$0xf]
        %v804 = vld [vmem:[%s4 + $0x38] sm:$0xf]
        %v805 = vld [vmem:[%s4 + $0x3c] sm:$0xf]
        %v806 = vld [vmem:[%s5] sm:$0x1]
        %v808 = vlaneseq
        %v809 = vshrl.u32 %v808, 7
        %v810 = vsub.s32 0, %v809
        %v811 = vrot.slane %v806, %v810
        %v829 = vunpack.c.l.b16 %v790
        %v830 = vunpack.c.l.b16 %v791
        %v831 = vunpack.c.l.b16 %v792
        %v832 = vunpack.c.l.b16 %v793
        %v833 = vunpack.c.l.b16 %v794
        %v834 = vunpack.c.l.b16 %v795
        %v835 = vunpack.c.l.b16 %v796
        %v836 = vunpack.c.l.b16 %v797
        %v837 = vunpack.c.l.b16 %v798
        %v838 = vunpack.c.l.b16 %v799
        %v839 = vunpack.c.l.b16 %v800
        %v840 = vunpack.c.l.b16 %v801
        %v841 = vunpack.c.l.b16 %v802
        %v842 = vunpack.c.l.b16 %v803
        %v843 = vunpack.c.l.b16 %v804
        %v844 = vunpack.c.l.b16 %v805
        %v845 = vpack.c.b16 %v830, %v829
        %v846 = vpack.c.b16 %v832, %v831
        %v847 = vpack.c.b16 %v834, %v833
        %v848 = vpack.c.b16 %v836, %v835
        %v849 = vpack.c.b16 %v838, %v837
        %v850 = vpack.c.b16 %v840, %v839
        %v851 = vpack.c.b16 %v842, %v841
        %v852 = vpack.c.b16 %v844, %v843
        %861 = vmatprep.subr.bf16.mxu0 0
        %862 = vmatpush1.bf16.msra.mxu0 %v845
        %863 = vmatprep.subr.bf16.mxu0 0
        %864 = vmatpush1.bf16.msra.mxu0 %v846
        %865 = vmatprep.subr.bf16.mxu0 0
        %866 = vmatpush1.bf16.msra.mxu0 %v847
        %867 = vmatprep.subr.bf16.mxu0 0
        %868 = vmatpush1.bf16.msra.mxu0 %v848
        %869 = vmatprep.subr.bf16.mxu0 0
        %870 = vmatpush1.bf16.msra.mxu0 %v849
        %871 = vmatprep.subr.bf16.mxu0 0
        %872 = vmatpush1.bf16.msra.mxu0 %v850
        %873 = vmatprep.subr.bf16.mxu0 0
        %874 = vmatpush1.bf16.msra.mxu0 %v851
        %875 = vmatprep.subr.bf16.mxu0 0
        %876 = vmatpush1.bf16.msra.mxu0 %v852
        %877 = vmatprep.subr.bf16.mxu0 0
        %878 = vmatpush1.bf16.msra.mxu0 0
        %879 = vmatprep.subr.bf16.mxu0 0
        %880 = vmatpush1.bf16.msra.mxu0 0
        %881 = vmatprep.subr.bf16.mxu0 0
        %882 = vmatpush1.bf16.msra.mxu0 0
        %883 = vmatprep.subr.bf16.mxu0 0
        %884 = vmatpush1.bf16.msra.mxu0 0
        %885 = vmatprep.subr.bf16.mxu0 0
        %886 = vmatpush1.bf16.msra.mxu0 0
        %887 = vmatprep.subr.bf16.mxu0 0
        %888 = vmatpush1.bf16.msra.mxu0 0
        %889 = vmatprep.subr.bf16.mxu0 0
        %890 = vmatpush1.bf16.msra.mxu0 0
        %891 = vmatprep.subr.bf16.mxu0 0
        %892 = vmatpush1.bf16.msra.mxu0 0
        %893 = vmatprep.mubr.bf16.mxu0 0
        %894 = vmatmul.mubr.bf16.gmra.mrb[0].mxu0 %v782
        %v895 = vpop.f32.mrb[0].mxu0
        %v896 = vadd.f32 %v811, %v895
        %v897 = vpop.f32.mrb[0].mxu0
        %v898 = vpop.f32.mrb[0].mxu0
        %v899 = vadd.f32 %v811, %v898
        %v900 = vpop.f32.mrb[0].mxu0
        %901 = vmatprep.mubr.bf16.mxu0 0
        %902 = vmatmul.mubr.bf16.gmra.mrb[0].mxu0 %v783
        %v903 = vpop.f32.mrb[0].mxu0
        %v904 = vadd.f32 %v811, %v903
        %v905 = vpop.f32.mrb[0].mxu0
        %v906 = vpop.f32.mrb[0].mxu0
        %v907 = vadd.f32 %v811, %v906
        %v908 = vpop.f32.mrb[0].mxu0
        %909 = vmatprep.mubr.bf16.mxu0 0
        %910 = vmatmul.mubr.bf16.gmra.mrb[0].mxu0 %v784
        %v911 = vpop.f32.mrb[0].mxu0
        %v912 = vadd.f32 %v811, %v911
        %v913 = vpop.f32.mrb[0].mxu0
        %v914 = vpop.f32.mrb[0].mxu0
        %v915 = vadd.f32 %v811, %v914
        %v916 = vpop.f32.mrb[0].mxu0
        %917 = vmatprep.mubr.bf16.mxu0 0
        %918 = vmatmul.mubr.bf16.gmra.mrb[0].mxu0 %v785
        %v919 = vpop.f32.mrb[0].mxu0
        %v920 = vadd.f32 %v811, %v919
        %v921 = vpop.f32.mrb[0].mxu0
        %v922 = vpop.f32.mrb[0].mxu0
        %v923 = vadd.f32 %v811, %v922
        %v924 = vpop.f32.mrb[0].mxu0
        %925 = vmatprep.mubr.bf16.mxu0 0
        %926 = vmatmul.mubr.bf16.gmra.mrb[0].mxu0 %v786
        %v927 = vpop.f32.mrb[0].mxu0
        %v928 = vadd.f32 %v811, %v927
        %v929 = vpop.f32.mrb[0].mxu0
        %v930 = vpop.f32.mrb[0].mxu0
        %v931 = vadd.f32 %v811, %v930
        %v932 = vpop.f32.mrb[0].mxu0
        %933 = vmatprep.mubr.bf16.mxu0 0
        %934 = vmatmul.mubr.bf16.gmra.mrb[0].mxu0 %v787
        %v935 = vpop.f32.mrb[0].mxu0
        %v936 = vadd.f32 %v811, %v935
        %v937 = vpop.f32.mrb[0].mxu0
        %v938 = vpop.f32.mrb[0].mxu0
        %v939 = vadd.f32 %v811, %v938
        %v940 = vpop.f32.mrb[0].mxu0
        %941 = vmatprep.mubr.bf16.mxu0 0
        %942 = vmatmul.mubr.bf16.gmra.mrb[0].mxu0 %v788
        %v943 = vpop.f32.mrb[0].mxu0
        %v944 = vadd.f32 %v811, %v943
        %v945 = vpop.f32.mrb[0].mxu0
        %v946 = vpop.f32.mrb[0].mxu0
        %v947 = vadd.f32 %v811, %v946
        %v948 = vpop.f32.mrb[0].mxu0
        %949 = vmatprep.mubr.bf16.mxu0 0
        %950 = vmatmul.mubr.bf16.gmra.mrb[0].mxu0 %v789
        %v951 = vpop.f32.mrb[0].mxu0
        %v952 = vadd.f32 %v811, %v951
        %v953 = vpop.f32.mrb[0].mxu0
        %v954 = vpop.f32.mrb[0].mxu0
        %v955 = vadd.f32 %v811, %v954
        %v956 = vpop.f32.mrb[0].mxu0
        %957 = vdwg.mxu0
        %v958 = vmax.f32 %v896, 0.0
        %v959 = vmax.f32 %v899, 0.0
        %v960 = vmax.f32 %v904, 0.0
        %v961 = vmax.f32 %v907, 0.0
        %v962 = vmax.f32 %v912, 0.0
        %v963 = vmax.f32 %v915, 0.0
        %v964 = vmax.f32 %v920, 0.0
        %v965 = vmax.f32 %v923, 0.0
        %v966 = vmax.f32 %v928, 0.0
        %v967 = vmax.f32 %v931, 0.0
        %v968 = vmax.f32 %v936, 0.0
        %v969 = vmax.f32 %v939, 0.0
        %v970 = vmax.f32 %v944, 0.0
        %v971 = vmax.f32 %v947, 0.0
        %v972 = vmax.f32 %v952, 0.0
        %v973 = vmax.f32 %v955, 0.0
        %v974 = vpack.c.bf16 %v612, %v612
        %v975 = vld [vmem:[%s6] sm:$0xf]
        %v976 = vld [vmem:[%s6 + $0x4] sm:$0xf]
        %v977 = vld [vmem:[%s6 + $0x8] sm:$0xf]
        %v978 = vld [vmem:[%s6 + $0xc] sm:$0xf]
        %v979 = vld [vmem:[%s7] sm:$0x1]
        %v981 = vlaneseq
        %v982 = vshrl.u32 %v981, 7
        %v983 = vsub.s32 0, %v982
        %v984 = vrot.slane %v979, %v983
        %v990 = vunpack.c.l.b16 %v975
        %v991 = vunpack.c.l.b16 %v976
        %v992 = vunpack.c.l.b16 %v977
        %v993 = vunpack.c.l.b16 %v978
        %v994 = vpack.c.b16 %v991, %v990
        %v995 = vpack.c.b16 %v993, %v992
        %v999 = vsel %vm644, %v974, 0
        %1001 = vmatprep.subr.bf16.mxu0 0
        %1002 = vmatpush1.bf16.msra.mxu0 %v994
        %1003 = vmatprep.subr.bf16.mxu0 0
        %1004 = vmatpush1.bf16.msra.mxu0 %v995
        %1005 = vmatprep.subr.bf16.mxu0 0
        %1006 = vmatpush1.bf16.msra.mxu0 0
        %1007 = vmatprep.subr.bf16.mxu0 0
        %1008 = vmatpush1.bf16.msra.mxu0 0
        %1009 = vmatprep.subr.bf16.mxu0 0
        %1010 = vmatpush1.bf16.msra.mxu0 0
        %1011 = vmatprep.subr.bf16.mxu0 0
        %1012 = vmatpush1.bf16.msra.mxu0 0
        %1013 = vmatprep.subr.bf16.mxu0 0
        %1014 = vmatpush1.bf16.msra.mxu0 0
        %1015 = vmatprep.subr.bf16.mxu0 0
        %1016 = vmatpush1.bf16.msra.mxu0 0
        %1017 = vmatprep.subr.bf16.mxu0 0
        %1018 = vmatpush1.bf16.msra.mxu0 0
        %1019 = vmatprep.subr.bf16.mxu0 0
        %1020 = vmatpush1.bf16.msra.mxu0 0
        %1021 = vmatprep.subr.bf16.mxu0 0
        %1022 = vmatpush1.bf16.msra.mxu0 0
        %1023 = vmatprep.subr.bf16.mxu0 0
        %1024 = vmatpush1.bf16.msra.mxu0 0
        %1025 = vmatprep.subr.bf16.mxu0 0
        %1026 = vmatpush1.bf16.msra.mxu0 0
        %1027 = vmatprep.subr.bf16.mxu0 0
        %1028 = vmatpush1.bf16.msra.mxu0 0
        %1029 = vmatprep.subr.bf16.mxu0 0
        %1030 = vmatpush1.bf16.msra.mxu0 0
        %1031 = vmatprep.subr.bf16.mxu0 0
        %1032 = vmatpush1.bf16.msra.mxu0 0
        %1033 = vmatprep.mubr.bf16.mxu0 0
        %1034 = vmatmul.mubr.bf16.gmra.mrb[0].mxu0 %v999
        %v1035 = vpop.f32.mrb[0].mxu0
        %v1036 = vadd.f32 %v984, %v1035
        %v1037 = vpop.f32.mrb[0].mxu0
        %v1038 = vpop.f32.mrb[0].mxu0
        %v1039 = vpop.f32.mrb[0].mxu0
        %1040 = vdwg.mxu0
        %v1041 = vmax.f32 %v1036, 0.0
        %v1042 = vpack.c.bf16 %v1041, %v1041
        %v1043 = vld [vmem:[%s8] sm:$0xf]
        %v1044 = vld [vmem:[%s8 + $0x4] sm:$0xf]
        %v1045 = vld [vmem:[%s8 + $0x8] sm:$0xf]
        %v1046 = vld [vmem:[%s8 + $0xc] sm:$0xf]
        %v1047 = vld [vmem:[%s8 + $0x10] sm:$0xf]
        %v1048 = vld [vmem:[%s8 + $0x14] sm:$0xf]
        %v1049 = vld [vmem:[%s8 + $0x18] sm:$0xf]
        %v1050 = vld [vmem:[%s8 + $0x1c] sm:$0xf]
        %v1051 = vld [vmem:[%s8 + $0x20] sm:$0xf]
        %v1052 = vld [vmem:[%s8 + $0x24] sm:$0xf]
        %v1053 = vld [vmem:[%s8 + $0x28] sm:$0xf]
        %v1054 = vld [vmem:[%s8 + $0x2c] sm:$0xf]
        %v1055 = vld [vmem:[%s8 + $0x30] sm:$0xf]
        %v1056 = vld [vmem:[%s8 + $0x34] sm:$0xf]
        %v1057 = vld [vmem:[%s8 + $0x38] sm:$0xf]
        %v1058 = vld [vmem:[%s8 + $0x3c] sm:$0xf]
        %v1059 = vld [vmem:[%s9] sm:$0x1]
        %v1061 = vlaneseq
        %v1062 = vshrl.u32 %v1061, 7
        %v1063 = vsub.s32 0, %v1062
        %v1064 = vrot.slane %v1059, %v1063
        %v1082 = vunpack.c.l.b16 %v1043
        %v1083 = vunpack.c.l.b16 %v1044
        %v1084 = vunpack.c.l.b16 %v1045
        %v1085 = vunpack.c.l.b16 %v1046
        %v1086 = vunpack.c.l.b16 %v1047
        %v1087 = vunpack.c.l.b16 %v1048
        %v1088 = vunpack.c.l.b16 %v1049
        %v1089 = vunpack.c.l.b16 %v1050
        %v1090 = vunpack.c.l.b16 %v1051
        %v1091 = vunpack.c.l.b16 %v1052
        %v1092 = vunpack.c.l.b16 %v1053
        %v1093 = vunpack.c.l.b16 %v1054
        %v1094 = vunpack.c.l.b16 %v1055
        %v1095 = vunpack.c.l.b16 %v1056
        %v1096 = vunpack.c.l.b16 %v1057
        %v1097 = vunpack.c.l.b16 %v1058
        %v1098 = vpack.c.b16 %v1083, %v1082
        %v1099 = vpack.c.b16 %v1085, %v1084
        %v1100 = vpack.c.b16 %v1087, %v1086
        %v1101 = vpack.c.b16 %v1089, %v1088
        %v1102 = vpack.c.b16 %v1091, %v1090
        %v1103 = vpack.c.b16 %v1093, %v1092
        %v1104 = vpack.c.b16 %v1095, %v1094
        %v1105 = vpack.c.b16 %v1097, %v1096
        %1114 = vmatprep.subr.bf16.mxu0 0
        %1115 = vmatpush1.bf16.msra.mxu0 %v1098
        %1116 = vmatprep.subr.bf16.mxu0 0
        %1117 = vmatpush1.bf16.msra.mxu0 %v1099
        %1118 = vmatprep.subr.bf16.mxu0 0
        %1119 = vmatpush1.bf16.msra.mxu0 %v1100
        %1120 = vmatprep.subr.bf16.mxu0 0
        %1121 = vmatpush1.bf16.msra.mxu0 %v1101
        %1122 = vmatprep.subr.bf16.mxu0 0
        %1123 = vmatpush1.bf16.msra.mxu0 %v1102
        %1124 = vmatprep.subr.bf16.mxu0 0
        %1125 = vmatpush1.bf16.msra.mxu0 %v1103
        %1126 = vmatprep.subr.bf16.mxu0 0
        %1127 = vmatpush1.bf16.msra.mxu0 %v1104
        %1128 = vmatprep.subr.bf16.mxu0 0
        %1129 = vmatpush1.bf16.msra.mxu0 %v1105
        %1130 = vmatprep.subr.bf16.mxu0 0
        %1131 = vmatpush1.bf16.msra.mxu0 0
        %1132 = vmatprep.subr.bf16.mxu0 0
        %1133 = vmatpush1.bf16.msra.mxu0 0
        %1134 = vmatprep.subr.bf16.mxu0 0
        %1135 = vmatpush1.bf16.msra.mxu0 0
        %1136 = vmatprep.subr.bf16.mxu0 0
        %1137 = vmatpush1.bf16.msra.mxu0 0
        %1138 = vmatprep.subr.bf16.mxu0 0
        %1139 = vmatpush1.bf16.msra.mxu0 0
        %1140 = vmatprep.subr.bf16.mxu0 0
        %1141 = vmatpush1.bf16.msra.mxu0 0
        %1142 = vmatprep.subr.bf16.mxu0 0
        %1143 = vmatpush1.bf16.msra.mxu0 0
        %1144 = vmatprep.subr.bf16.mxu0 0
        %1145 = vmatpush1.bf16.msra.mxu0 0
        %1146 = vmatprep.mubr.bf16.mxu0 0
        %1147 = vmatmul.mubr.bf16.gmra.mrb[0].mxu0 %v1042
        %v1148 = vpop.f32.mrb[0].mxu0
        %v1149 = vadd.f32 %v1064, %v1148
        %v1150 = vpop.f32.mrb[0].mxu0
        %v1151 = vpop.f32.mrb[0].mxu0
        %v1152 = vpop.f32.mrb[0].mxu0
        %1153 = vdwg.mxu0
        %v1154 = vmax.f32 %v1149, 0.0
        %v1155 = vld [vmem:[%s10] sm:$0xf]
        %v1156 = vld [vmem:[%s10 + $0x4] sm:$0xf]
        %v1157 = vld [vmem:[%s10 + $0x8] sm:$0xf]
        %v1158 = vld [vmem:[%s10 + $0xc] sm:$0xf]
        %v1159 = vld [vmem:[%s11] sm:$0x1]
        %v1161 = vlaneseq
        %v1162 = vshrl.u32 %v1161, 7
        %v1163 = vsub.s32 0, %v1162
        %v1164 = vrot.slane %v1159, %v1163
        %v1170 = vunpack.c.l.b16 %v1155
        %v1171 = vunpack.c.l.b16 %v1156
        %v1172 = vunpack.c.l.b16 %v1157
        %v1173 = vunpack.c.l.b16 %v1158
        %v1174 = vpack.c.b16 %v1171, %v1170
        %v1175 = vpack.c.b16 %v1173, %v1172
        %1178 = vmatprep.subr.bf16.mxu0 0
        %1179 = vmatpush1.bf16.msra.mxu0 %v1174
        %1180 = vmatprep.subr.bf16.mxu0 0
        %1181 = vmatpush1.bf16.msra.mxu0 %v1175
        %1182 = vmatprep.subr.bf16.mxu0 0
        %1183 = vmatpush1.bf16.msra.mxu0 0
        %1184 = vmatprep.subr.bf16.mxu0 0
        %1185 = vmatpush1.bf16.msra.mxu0 0
        %1186 = vmatprep.subr.bf16.mxu0 0
        %1187 = vmatpush1.bf16.msra.mxu0 0
        %1188 = vmatprep.subr.bf16.mxu0 0
        %1189 = vmatpush1.bf16.msra.mxu0 0
        %1190 = vmatprep.subr.bf16.mxu0 0
        %1191 = vmatpush1.bf16.msra.mxu0 0
        %1192 = vmatprep.subr.bf16.mxu0 0
        %1193 = vmatpush1.bf16.msra.mxu0 0
        %1194 = vmatprep.subr.bf16.mxu0 0
        %1195 = vmatpush1.bf16.msra.mxu0 0
        %1196 = vmatprep.subr.bf16.mxu0 0
        %1197 = vmatpush1.bf16.msra.mxu0 0
        %1198 = vmatprep.subr.bf16.mxu0 0
        %1199 = vmatpush1.bf16.msra.mxu0 0
        %1200 = vmatprep.subr.bf16.mxu0 0
        %1201 = vmatpush1.bf16.msra.mxu0 0
        %1202 = vmatprep.subr.bf16.mxu0 0
        %1203 = vmatpush1.bf16.msra.mxu0 0
        %1204 = vmatprep.subr.bf16.mxu0 0
        %1205 = vmatpush1.bf16.msra.mxu0 0
        %1206 = vmatprep.subr.bf16.mxu0 0
        %1207 = vmatpush1.bf16.msra.mxu0 0
        %1208 = vmatprep.subr.bf16.mxu0 0
        %1209 = vmatpush1.bf16.msra.mxu0 0
        %1210 = vmatprep.mubr.bf16.mxu0 0
        %1211 = vmatmul.mubr.bf16.gmra.mrb[0].mxu0 %v999
        %v1212 = vpop.f32.mrb[0].mxu0
        %v1213 = vadd.f32 %v1164, %v1212
        %v1214 = vpop.f32.mrb[0].mxu0
        %v1215 = vpop.f32.mrb[0].mxu0
        %v1216 = vpop.f32.mrb[0].mxu0
        %1217 = vdwg.mxu0
        %v1218 = vmax.f32 %v1213, 0.0
        %v1219 = vpack.c.bf16 %v959, %v958
        %v1220 = vpack.c.bf16 %v961, %v960
        %v1221 = vpack.c.bf16 %v963, %v962
        %v1222 = vpack.c.bf16 %v965, %v964
        %v1223 = vpack.c.bf16 %v967, %v966
        %v1224 = vpack.c.bf16 %v969, %v968
        %v1225 = vpack.c.bf16 %v971, %v970
        %v1226 = vpack.c.bf16 %v973, %v972
        %v1227 = vpack.c.bf16 %v1154, %v1154
        %1228 = vmatprep.subr.bf16.mxu0 0
        %1229 = vmatpush1.bf16.xpose.msra.mxu0 %v1227
        %1230 = vmatprep.subr.bf16.mxu0 0
        %1231 = vmatpush1.bf16.xpose.msra.mxu0 0
        %1232 = vmatprep.subr.bf16.mxu0 0
        %1233 = vmatpush1.bf16.xpose.msra.mxu0 0
        %1234 = vmatprep.subr.bf16.mxu0 0
        %1235 = vmatpush1.bf16.xpose.msra.mxu0 0
        %1236 = vmatprep.subr.bf16.mxu0 0
        %1237 = vmatpush1.bf16.xpose.msra.mxu0 0
        %1238 = vmatprep.subr.bf16.mxu0 0
        %1239 = vmatpush1.bf16.xpose.msra.mxu0 0
        %1240 = vmatprep.subr.bf16.mxu0 0
        %1241 = vmatpush1.bf16.xpose.msra.mxu0 0
        %1242 = vmatprep.subr.bf16.mxu0 0
        %1243 = vmatpush1.bf16.xpose.msra.mxu0 0
        %1244 = vmatprep.subr.bf16.mxu0 0
        %1245 = vmatpush1.bf16.xpose.msra.mxu0 0
        %1246 = vmatprep.subr.bf16.mxu0 0
        %1247 = vmatpush1.bf16.xpose.msra.mxu0 0
        %1248 = vmatprep.subr.bf16.mxu0 0
        %1249 = vmatpush1.bf16.xpose.msra.mxu0 0
        %1250 = vmatprep.subr.bf16.mxu0 0
        %1251 = vmatpush1.bf16.xpose.msra.mxu0 0
        %1252 = vmatprep.subr.bf16.mxu0 0
        %1253 = vmatpush1.bf16.xpose.msra.mxu0 0
        %1254 = vmatprep.subr.bf16.mxu0 0
        %1255 = vmatpush1.bf16.xpose.msra.mxu0 0
        %1256 = vmatprep.subr.bf16.mxu0 0
        %1257 = vmatpush1.bf16.xpose.msra.mxu0 0
        %1258 = vmatprep.subr.bf16.mxu0 0
        %1259 = vmatpush1.bf16.xpose.msra.mxu0 0
        %1260 = vmatprep.mubr.bf16.mxu0 0
        %1261 = vmatmul.mubr.bf16.gmra.mrb[0].mxu0 %v1219
        %v1262 = vpop.f32.mrb[0].mxu0
        %v1263 = vadd.f32 0.0, %v1262
        %v1264 = vpop.f32.mrb[0].mxu0
        %v1265 = vpop.f32.mrb[0].mxu0
        %v1266 = vadd.f32 0.0, %v1265
        %v1267 = vpop.f32.mrb[0].mxu0
        %1268 = vmatprep.mubr.bf16.mxu0 0
        %1269 = vmatmul.mubr.bf16.gmra.mrb[0].mxu0 %v1220
        %v1270 = vpop.f32.mrb[0].mxu0
        %v1271 = vadd.f32 0.0, %v1270
        %v1272 = vpop.f32.mrb[0].mxu0
        %v1273 = vpop.f32.mrb[0].mxu0
        %v1274 = vadd.f32 0.0, %v1273
        %v1275 = vpop.f32.mrb[0].mxu0
        %1276 = vmatprep.mubr.bf16.mxu0 0
        %1277 = vmatmul.mubr.bf16.gmra.mrb[0].mxu0 %v1221
        %v1278 = vpop.f32.mrb[0].mxu0
        %v1279 = vadd.f32 0.0, %v1278
        %v1280 = vpop.f32.mrb[0].mxu0
        %v1281 = vpop.f32.mrb[0].mxu0
        %v1282 = vadd.f32 0.0, %v1281
        %v1283 = vpop.f32.mrb[0].mxu0
        %1284 = vmatprep.mubr.bf16.mxu0 0
        %1285 = vmatmul.mubr.bf16.gmra.mrb[0].mxu0 %v1222
        %v1286 = vpop.f32.mrb[0].mxu0
        %v1287 = vadd.f32 0.0, %v1286
        %v1288 = vpop.f32.mrb[0].mxu0
        %v1289 = vpop.f32.mrb[0].mxu0
        %v1290 = vadd.f32 0.0, %v1289
        %v1291 = vpop.f32.mrb[0].mxu0
        %1292 = vmatprep.mubr.bf16.mxu0 0
        %1293 = vmatmul.mubr.bf16.gmra.mrb[0].mxu0 %v1223
        %v1294 = vpop.f32.mrb[0].mxu0
        %v1295 = vadd.f32 0.0, %v1294
        %v1296 = vpop.f32.mrb[0].mxu0
        %v1297 = vpop.f32.mrb[0].mxu0
        %v1298 = vadd.f32 0.0, %v1297
        %v1299 = vpop.f32.mrb[0].mxu0
        %1300 = vmatprep.mubr.bf16.mxu0 0
        %1301 = vmatmul.mubr.bf16.gmra.mrb[0].mxu0 %v1224
        %v1302 = vpop.f32.mrb[0].mxu0
        %v1303 = vadd.f32 0.0, %v1302
        %v1304 = vpop.f32.mrb[0].mxu0
        %v1305 = vpop.f32.mrb[0].mxu0
        %v1306 = vadd.f32 0.0, %v1305
        %v1307 = vpop.f32.mrb[0].mxu0
        %1308 = vmatprep.mubr.bf16.mxu0 0
        %1309 = vmatmul.mubr.bf16.gmra.mrb[0].mxu0 %v1225
        %v1310 = vpop.f32.mrb[0].mxu0
        %v1311 = vadd.f32 0.0, %v1310
        %v1312 = vpop.f32.mrb[0].mxu0
        %v1313 = vpop.f32.mrb[0].mxu0
        %v1314 = vadd.f32 0.0, %v1313
        %v1315 = vpop.f32.mrb[0].mxu0
        %1316 = vmatprep.mubr.bf16.mxu0 0
        %1317 = vmatmul.mubr.bf16.gmra.mrb[0].mxu0 %v1226
        %v1318 = vpop.f32.mrb[0].mxu0
        %v1319 = vadd.f32 0.0, %v1318
        %v1320 = vpop.f32.mrb[0].mxu0
        %v1321 = vpop.f32.mrb[0].mxu0
        %v1322 = vadd.f32 0.0, %v1321
        %v1323 = vpop.f32.mrb[0].mxu0
        %1324 = vdwg.mxu0
        %vm1325 = vcmask 64512
        %v1326 = vsel %vm1325, %v1263, -inf
        %1327 = vmax.xlane.f32.xlu0 %v1326
        %v1328 = vpop.xlane.xlu0 %1327
        %v1329 = vsel %vm1325, %v1266, -inf
        %1330 = vmax.xlane.f32.xlu0 %v1329
        %v1331 = vpop.xlane.xlu0 %1330
        %v1332 = vsel %vm1325, %v1271, -inf
        %1333 = vmax.xlane.f32.xlu0 %v1332
        %v1334 = vpop.xlane.xlu0 %1333
        %v1335 = vsel %vm1325, %v1274, -inf
        %1336 = vmax.xlane.f32.xlu0 %v1335
        %v1337 = vpop.xlane.xlu0 %1336
        %v1338 = vsel %vm1325, %v1279, -inf
        %1339 = vmax.xlane.f32.xlu0 %v1338
        %v1340 = vpop.xlane.xlu0 %1339
        %v1341 = vsel %vm1325, %v1282, -inf
        %1342 = vmax.xlane.f32.xlu0 %v1341
        %v1343 = vpop.xlane.xlu0 %1342
        %v1344 = vsel %vm1325, %v1287, -inf
        %1345 = vmax.xlane.f32.xlu0 %v1344
        %v1346 = vpop.xlane.xlu0 %1345
        %v1347 = vsel %vm1325, %v1290, -inf
        %1348 = vmax.xlane.f32.xlu0 %v1347
        %v1349 = vpop.xlane.xlu0 %1348
        %v1350 = vsel %vm1325, %v1295, -inf
        %1351 = vmax.xlane.f32.xlu0 %v1350
        %v1352 = vpop.xlane.xlu0 %1351
        %v1353 = vsel %vm1325, %v1298, -inf
        %1354 = vmax.xlane.f32.xlu0 %v1353
        %v1355 = vpop.xlane.xlu0 %1354
        %v1356 = vsel %vm1325, %v1303, -inf
        %1357 = vmax.xlane.f32.xlu0 %v1356
        %v1358 = vpop.xlane.xlu0 %1357
        %v1359 = vsel %vm1325, %v1306, -inf
        %1360 = vmax.xlane.f32.xlu0 %v1359
        %v1361 = vpop.xlane.xlu0 %1360
        %v1362 = vsel %vm1325, %v1311, -inf
        %1363 = vmax.xlane.f32.xlu0 %v1362
        %v1364 = vpop.xlane.xlu0 %1363
        %v1365 = vsel %vm1325, %v1314, -inf
        %1366 = vmax.xlane.f32.xlu0 %v1365
        %v1367 = vpop.xlane.xlu0 %1366
        %v1368 = vsel %vm1325, %v1319, -inf
        %1369 = vmax.xlane.f32.xlu0 %v1368
        %v1370 = vpop.xlane.xlu0 %1369
        %v1371 = vsel %vm1325, %v1322, -inf
        %1372 = vmax.xlane.f32.xlu0 %v1371
        %v1373 = vpop.xlane.xlu0 %1372
        %v1374 = vsub.f32 %v1263, %v1328
        %v1375 = vsub.f32 %v1266, %v1331
        %v1376 = vsub.f32 %v1271, %v1334
        %v1377 = vsub.f32 %v1274, %v1337
        %v1378 = vsub.f32 %v1279, %v1340
        %v1379 = vsub.f32 %v1282, %v1343
        %v1380 = vsub.f32 %v1287, %v1346
        %v1381 = vsub.f32 %v1290, %v1349
        %v1382 = vsub.f32 %v1295, %v1352
        %v1383 = vsub.f32 %v1298, %v1355
        %v1384 = vsub.f32 %v1303, %v1358
        %v1385 = vsub.f32 %v1306, %v1361
        %v1386 = vsub.f32 %v1311, %v1364
        %v1387 = vsub.f32 %v1314, %v1367
        %v1388 = vsub.f32 %v1319, %v1370
        %v1389 = vsub.f32 %v1322, %v1373
        %v1390 = vmul.f32 %v1374, 1.442695
        %v1391 = vpow.pop %v1390
        %v1392 = vmul.f32 %v1375, 1.442695
        %v1393 = vpow.pop %v1392
        %v1394 = vmul.f32 %v1376, 1.442695
        %v1395 = vpow.pop %v1394
        %v1396 = vmul.f32 %v1377, 1.442695
        %v1397 = vpow.pop %v1396
        %v1398 = vmul.f32 %v1378, 1.442695
        %v1399 = vpow.pop %v1398
        %v1400 = vmul.f32 %v1379, 1.442695
        %v1401 = vpow.pop %v1400
        %v1402 = vmul.f32 %v1380, 1.442695
        %v1403 = vpow.pop %v1402
        %v1404 = vmul.f32 %v1381, 1.442695
        %v1405 = vpow.pop %v1404
        %v1406 = vmul.f32 %v1382, 1.442695
        %v1407 = vpow.pop %v1406
        %v1408 = vmul.f32 %v1383, 1.442695
        %v1409 = vpow.pop %v1408
        %v1410 = vmul.f32 %v1384, 1.442695
        %v1411 = vpow.pop %v1410
        %v1412 = vmul.f32 %v1385, 1.442695
        %v1413 = vpow.pop %v1412
        %v1414 = vmul.f32 %v1386, 1.442695
        %v1415 = vpow.pop %v1414
        %v1416 = vmul.f32 %v1387, 1.442695
        %v1417 = vpow.pop %v1416
        %v1418 = vmul.f32 %v1388, 1.442695
        %v1419 = vpow.pop %v1418
        %v1420 = vmul.f32 %v1389, 1.442695
        %v1421 = vpow.pop %v1420
        %v1422 = vsel %vm1325, %v1391, 0.0
        %1423 = vadd.xlane.f32.xlu0 %v1422
        %v1424 = vpop.xlane.xlu0 %1423
        %v1425 = vsel %vm1325, %v1393, 0.0
        %1426 = vadd.xlane.f32.xlu0 %v1425
        %v1427 = vpop.xlane.xlu0 %1426
        %v1428 = vsel %vm1325, %v1395, 0.0
        %1429 = vadd.xlane.f32.xlu0 %v1428
        %v1430 = vpop.xlane.xlu0 %1429
        %v1431 = vsel %vm1325, %v1397, 0.0
        %1432 = vadd.xlane.f32.xlu0 %v1431
        %v1433 = vpop.xlane.xlu0 %1432
        %v1434 = vsel %vm1325, %v1399, 0.0
        %1435 = vadd.xlane.f32.xlu0 %v1434
        %v1436 = vpop.xlane.xlu0 %1435
        %v1437 = vsel %vm1325, %v1401, 0.0
        %1438 = vadd.xlane.f32.xlu0 %v1437
        %v1439 = vpop.xlane.xlu0 %1438
        %v1440 = vsel %vm1325, %v1403, 0.0
        %1441 = vadd.xlane.f32.xlu0 %v1440
        %v1442 = vpop.xlane.xlu0 %1441
        %v1443 = vsel %vm1325, %v1405, 0.0
        %1444 = vadd.xlane.f32.xlu0 %v1443
        %v1445 = vpop.xlane.xlu0 %1444
        %v1446 = vsel %vm1325, %v1407, 0.0
        %1447 = vadd.xlane.f32.xlu0 %v1446
        %v1448 = vpop.xlane.xlu0 %1447
        %v1449 = vsel %vm1325, %v1409, 0.0
        %1450 = vadd.xlane.f32.xlu0 %v1449
        %v1451 = vpop.xlane.xlu0 %1450
        %v1452 = vsel %vm1325, %v1411, 0.0
        %1453 = vadd.xlane.f32.xlu0 %v1452
        %v1454 = vpop.xlane.xlu0 %1453
        %v1455 = vsel %vm1325, %v1413, 0.0
        %1456 = vadd.xlane.f32.xlu0 %v1455
        %v1457 = vpop.xlane.xlu0 %1456
        %v1458 = vsel %vm1325, %v1415, 0.0
        %1459 = vadd.xlane.f32.xlu0 %v1458
        %v1460 = vpop.xlane.xlu0 %1459
        %v1461 = vsel %vm1325, %v1417, 0.0
        %1462 = vadd.xlane.f32.xlu0 %v1461
        %v1463 = vpop.xlane.xlu0 %1462
        %v1464 = vsel %vm1325, %v1419, 0.0
        %1465 = vadd.xlane.f32.xlu0 %v1464
        %v1466 = vpop.xlane.xlu0 %1465
        %v1467 = vsel %vm1325, %v1421, 0.0
        %1468 = vadd.xlane.f32.xlu0 %v1467
        %v1469 = vpop.xlane.xlu0 %1468
        %v1470 = vrcp.pop %v1424
        %v1471 = vrcp.pop %v1427
        %v1472 = vrcp.pop %v1430
        %v1473 = vrcp.pop %v1433
        %v1474 = vrcp.pop %v1436
        %v1475 = vrcp.pop %v1439
        %v1476 = vrcp.pop %v1442
        %v1477 = vrcp.pop %v1445
        %v1478 = vrcp.pop %v1448
        %v1479 = vrcp.pop %v1451
        %v1480 = vrcp.pop %v1454
        %v1481 = vrcp.pop %v1457
        %v1482 = vrcp.pop %v1460
        %v1483 = vrcp.pop %v1463
        %v1484 = vrcp.pop %v1466
        %v1485 = vrcp.pop %v1469
        %v1486 = vmul.f32 %v1391, %v1470
        %v1487 = vmul.f32 %v1393, %v1471
        %v1488 = vmul.f32 %v1395, %v1472
        %v1489 = vmul.f32 %v1397, %v1473
        %v1490 = vmul.f32 %v1399, %v1474
        %v1491 = vmul.f32 %v1401, %v1475
        %v1492 = vmul.f32 %v1403, %v1476
        %v1493 = vmul.f32 %v1405, %v1477
        %v1494 = vmul.f32 %v1407, %v1478
        %v1495 = vmul.f32 %v1409, %v1479
        %v1496 = vmul.f32 %v1411, %v1480
        %v1497 = vmul.f32 %v1413, %v1481
        %v1498 = vmul.f32 %v1415, %v1482
        %v1499 = vmul.f32 %v1417, %v1483
        %v1500 = vmul.f32 %v1419, %v1484
        %v1501 = vmul.f32 %v1421, %v1485
        %v1502 = vpack.c.bf16 %v1487, %v1486
        %v1503 = vpack.c.bf16 %v1489, %v1488
        %v1504 = vpack.c.bf16 %v1491, %v1490
        %v1505 = vpack.c.bf16 %v1493, %v1492
        %v1506 = vpack.c.bf16 %v1495, %v1494
        %v1507 = vpack.c.bf16 %v1497, %v1496
        %v1508 = vpack.c.bf16 %v1499, %v1498
        %v1509 = vpack.c.bf16 %v1501, %v1500
        %v1510 = vpack.c.bf16 %v1218, %v1218
        %v1512 = vsel %vm1325, %v1502, 0
        %v1515 = vsel %vm1325, %v1503, 0
        %v1518 = vsel %vm1325, %v1504, 0
        %v1521 = vsel %vm1325, %v1505, 0
        %v1524 = vsel %vm1325, %v1506, 0
        %v1527 = vsel %vm1325, %v1507, 0
        %v1530 = vsel %vm1325, %v1508, 0
        %v1533 = vsel %vm1325, %v1509, 0
        %vm1535 = vcmask 1043456
        %v1537 = vsel %vm1535, %v1510, 0
        %1539 = vmatprep.subr.bf16.mxu0 0
        %1540 = vmatpush1.bf16.msra.mxu0 %v1537
        %1541 = vmatprep.subr.bf16.mxu0 0
        %1542 = vmatpush1.bf16.msra.mxu0 0
        %1543 = vmatprep.subr.bf16.mxu0 0
        %1544 = vmatpush1.bf16.msra.mxu0 0
        %1545 = vmatprep.subr.bf16.mxu0 0
        %1546 = vmatpush1.bf16.msra.mxu0 0
        %1547 = vmatprep.subr.bf16.mxu0 0
        %1548 = vmatpush1.bf16.msra.mxu0 0
        %1549 = vmatprep.subr.bf16.mxu0 0
        %1550 = vmatpush1.bf16.msra.mxu0 0
        %1551 = vmatprep.subr.bf16.mxu0 0
        %1552 = vmatpush1.bf16.msra.mxu0 0
        %1553 = vmatprep.subr.bf16.mxu0 0
        %1554 = vmatpush1.bf16.msra.mxu0 0
        %1555 = vmatprep.subr.bf16.mxu0 0
        %1556 = vmatpush1.bf16.msra.mxu0 0
        %1557 = vmatprep.subr.bf16.mxu0 0
        %1558 = vmatpush1.bf16.msra.mxu0 0
        %1559 = vmatprep.subr.bf16.mxu0 0
        %1560 = vmatpush1.bf16.msra.mxu0 0
        %1561 = vmatprep.subr.bf16.mxu0 0
        %1562 = vmatpush1.bf16.msra.mxu0 0
        %1563 = vmatprep.subr.bf16.mxu0 0
        %1564 = vmatpush1.bf16.msra.mxu0 0
        %1565 = vmatprep.subr.bf16.mxu0 0
        %1566 = vmatpush1.bf16.msra.mxu0 0
        %1567 = vmatprep.subr.bf16.mxu0 0
        %1568 = vmatpush1.bf16.msra.mxu0 0
        %1569 = vmatprep.subr.bf16.mxu0 0
        %1570 = vmatpush1.bf16.msra.mxu0 0
        %1571 = vmatprep.mubr.bf16.mxu0 0
        %1572 = vmatmul.mubr.bf16.gmra.mrb[0].mxu0 %v1512
        %v1573 = vpop.f32.mrb[0].mxu0
        %v1574 = vadd.f32 0.0, %v1573
        %v1575 = vpop.f32.mrb[0].mxu0
        %v1576 = vpop.f32.mrb[0].mxu0
        %v1577 = vadd.f32 0.0, %v1576
        %v1578 = vpop.f32.mrb[0].mxu0
        %1579 = vmatprep.mubr.bf16.mxu0 0
        %1580 = vmatmul.mubr.bf16.gmra.mrb[0].mxu0 %v1515
        %v1581 = vpop.f32.mrb[0].mxu0
        %v1582 = vadd.f32 0.0, %v1581
        %v1583 = vpop.f32.mrb[0].mxu0
        %v1584 = vpop.f32.mrb[0].mxu0
        %v1585 = vadd.f32 0.0, %v1584
        %v1586 = vpop.f32.mrb[0].mxu0
        %1587 = vmatprep.mubr.bf16.mxu0 0
        %1588 = vmatmul.mubr.bf16.gmra.mrb[0].mxu0 %v1518
        %v1589 = vpop.f32.mrb[0].mxu0
        %v1590 = vadd.f32 0.0, %v1589
        %v1591 = vpop.f32.mrb[0].mxu0
        %v1592 = vpop.f32.mrb[0].mxu0
        %v1593 = vadd.f32 0.0, %v1592
        %v1594 = vpop.f32.mrb[0].mxu0
        %1595 = vmatprep.mubr.bf16.mxu0 0
        %1596 = vmatmul.mubr.bf16.gmra.mrb[0].mxu0 %v1521
        %v1597 = vpop.f32.mrb[0].mxu0
        %v1598 = vadd.f32 0.0, %v1597
        %v1599 = vpop.f32.mrb[0].mxu0
        %v1600 = vpop.f32.mrb[0].mxu0
        %v1601 = vadd.f32 0.0, %v1600
        %v1602 = vpop.f32.mrb[0].mxu0
        %1603 = vmatprep.mubr.bf16.mxu0 0
        %1604 = vmatmul.mubr.bf16.gmra.mrb[0].mxu0 %v1524
        %v1605 = vpop.f32.mrb[0].mxu0
        %v1606 = vadd.f32 0.0, %v1605
        %v1607 = vpop.f32.mrb[0].mxu0
        %v1608 = vpop.f32.mrb[0].mxu0
        %v1609 = vadd.f32 0.0, %v1608
        %v1610 = vpop.f32.mrb[0].mxu0
        %1611 = vmatprep.mubr.bf16.mxu0 0
        %1612 = vmatmul.mubr.bf16.gmra.mrb[0].mxu0 %v1527
        %v1613 = vpop.f32.mrb[0].mxu0
        %v1614 = vadd.f32 0.0, %v1613
        %v1615 = vpop.f32.mrb[0].mxu0
        %v1616 = vpop.f32.mrb[0].mxu0
        %v1617 = vadd.f32 0.0, %v1616
        %v1618 = vpop.f32.mrb[0].mxu0
        %1619 = vmatprep.mubr.bf16.mxu0 0
        %1620 = vmatmul.mubr.bf16.gmra.mrb[0].mxu0 %v1530
        %v1621 = vpop.f32.mrb[0].mxu0
        %v1622 = vadd.f32 0.0, %v1621
        %v1623 = vpop.f32.mrb[0].mxu0
        %v1624 = vpop.f32.mrb[0].mxu0
        %v1625 = vadd.f32 0.0, %v1624
        %v1626 = vpop.f32.mrb[0].mxu0
        %1627 = vmatprep.mubr.bf16.mxu0 0
        %1628 = vmatmul.mubr.bf16.gmra.mrb[0].mxu0 %v1533
        %v1629 = vpop.f32.mrb[0].mxu0
        %v1630 = vadd.f32 0.0, %v1629
        %v1631 = vpop.f32.mrb[0].mxu0
        %v1632 = vpop.f32.mrb[0].mxu0
        %v1633 = vadd.f32 0.0, %v1632
        %v1634 = vpop.f32.mrb[0].mxu0
        %1635 = vdwg.mxu0
        %v1636 = vpack.c.bf16 %v1577, %v1574
        %v1637 = vpack.c.bf16 %v1585, %v1582
        %v1638 = vpack.c.bf16 %v1593, %v1590
        %v1639 = vpack.c.bf16 %v1601, %v1598
        %v1640 = vpack.c.bf16 %v1609, %v1606
        %v1641 = vpack.c.bf16 %v1617, %v1614
        %v1642 = vpack.c.bf16 %v1625, %v1622
        %v1643 = vpack.c.bf16 %v1633, %v1630
        %v1644 = vld [vmem:[%s12] sm:$0xf]
        %v1645 = vld [vmem:[%s12 + $0x4] sm:$0xf]
        %v1646 = vld [vmem:[%s12 + $0x8] sm:$0xf]
        %v1647 = vld [vmem:[%s12 + $0xc] sm:$0xf]
        %v1648 = vld [vmem:[%s12 + $0x10] sm:$0xf]
        %v1649 = vld [vmem:[%s12 + $0x14] sm:$0xf]
        %v1650 = vld [vmem:[%s12 + $0x18] sm:$0xf]
        %v1651 = vld [vmem:[%s12 + $0x1c] sm:$0xf]
        %v1652 = vld [vmem:[%s12 + $0x20] sm:$0xf]
        %v1653 = vld [vmem:[%s12 + $0x24] sm:$0xf]
        %v1654 = vld [vmem:[%s12 + $0x28] sm:$0xf]
        %v1655 = vld [vmem:[%s12 + $0x2c] sm:$0xf]
        %v1656 = vld [vmem:[%s12 + $0x30] sm:$0xf]
        %v1657 = vld [vmem:[%s12 + $0x34] sm:$0xf]
        %v1658 = vld [vmem:[%s12 + $0x38] sm:$0xf]
        %v1659 = vld [vmem:[%s12 + $0x3c] sm:$0xf]
        %v1660 = vld [vmem:[%s13] sm:$0x1]
        %v1662 = vlaneseq
        %v1663 = vshrl.u32 %v1662, 7
        %v1664 = vsub.s32 0, %v1663
        %v1665 = vrot.slane %v1660, %v1664
        %v1683 = vunpack.c.l.b16 %v1644
        %v1684 = vunpack.c.l.b16 %v1645
        %v1685 = vunpack.c.l.b16 %v1646
        %v1686 = vunpack.c.l.b16 %v1647
        %v1687 = vunpack.c.l.b16 %v1648
        %v1688 = vunpack.c.l.b16 %v1649
        %v1689 = vunpack.c.l.b16 %v1650
        %v1690 = vunpack.c.l.b16 %v1651
        %v1691 = vunpack.c.l.b16 %v1652
        %v1692 = vunpack.c.l.b16 %v1653
        %v1693 = vunpack.c.l.b16 %v1654
        %v1694 = vunpack.c.l.b16 %v1655
        %v1695 = vunpack.c.l.b16 %v1656
        %v1696 = vunpack.c.l.b16 %v1657
        %v1697 = vunpack.c.l.b16 %v1658
        %v1698 = vunpack.c.l.b16 %v1659
        %v1699 = vpack.c.b16 %v1684, %v1683
        %v1700 = vpack.c.b16 %v1686, %v1685
        %v1701 = vpack.c.b16 %v1688, %v1687
        %v1702 = vpack.c.b16 %v1690, %v1689
        %v1703 = vpack.c.b16 %v1692, %v1691
        %v1704 = vpack.c.b16 %v1694, %v1693
        %v1705 = vpack.c.b16 %v1696, %v1695
        %v1706 = vpack.c.b16 %v1698, %v1697
        %1715 = vmatprep.subr.bf16.mxu0 0
        %1716 = vmatpush1.bf16.msra.mxu0 %v1699
        %1717 = vmatprep.subr.bf16.mxu0 0
        %1718 = vmatpush1.bf16.msra.mxu0 %v1700
        %1719 = vmatprep.subr.bf16.mxu0 0
        %1720 = vmatpush1.bf16.msra.mxu0 %v1701
        %1721 = vmatprep.subr.bf16.mxu0 0
        %1722 = vmatpush1.bf16.msra.mxu0 %v1702
        %1723 = vmatprep.subr.bf16.mxu0 0
        %1724 = vmatpush1.bf16.msra.mxu0 %v1703
        %1725 = vmatprep.subr.bf16.mxu0 0
        %1726 = vmatpush1.bf16.msra.mxu0 %v1704
        %1727 = vmatprep.subr.bf16.mxu0 0
        %1728 = vmatpush1.bf16.msra.mxu0 %v1705
        %1729 = vmatprep.subr.bf16.mxu0 0
        %1730 = vmatpush1.bf16.msra.mxu0 %v1706
        %1731 = vmatprep.subr.bf16.mxu0 0
        %1732 = vmatpush1.bf16.msra.mxu0 0
        %1733 = vmatprep.subr.bf16.mxu0 0
        %1734 = vmatpush1.bf16.msra.mxu0 0
        %1735 = vmatprep.subr.bf16.mxu0 0
        %1736 = vmatpush1.bf16.msra.mxu0 0
        %1737 = vmatprep.subr.bf16.mxu0 0
        %1738 = vmatpush1.bf16.msra.mxu0 0
        %1739 = vmatprep.subr.bf16.mxu0 0
        %1740 = vmatpush1.bf16.msra.mxu0 0
        %1741 = vmatprep.subr.bf16.mxu0 0
        %1742 = vmatpush1.bf16.msra.mxu0 0
        %1743 = vmatprep.subr.bf16.mxu0 0
        %1744 = vmatpush1.bf16.msra.mxu0 0
        %1745 = vmatprep.subr.bf16.mxu0 0
        %1746 = vmatpush1.bf16.msra.mxu0 0
        %1747 = vmatprep.mubr.bf16.mxu0 0
        %1748 = vmatmul.mubr.bf16.gmra.mrb[0].mxu0 %v1636
        %v1749 = vpop.f32.mrb[0].mxu0
        %v1750 = vadd.f32 %v1665, %v1749
        %v1751 = vpop.f32.mrb[0].mxu0
        %v1752 = vpop.f32.mrb[0].mxu0
        %v1753 = vadd.f32 %v1665, %v1752
        %v1754 = vpop.f32.mrb[0].mxu0
        %1755 = vmatprep.mubr.bf16.mxu0 0
        %1756 = vmatmul.mubr.bf16.gmra.mrb[0].mxu0 %v1637
        %v1757 = vpop.f32.mrb[0].mxu0
        %v1758 = vadd.f32 %v1665, %v1757
        %v1759 = vpop.f32.mrb[0].mxu0
        %v1760 = vpop.f32.mrb[0].mxu0
        %v1761 = vadd.f32 %v1665, %v1760
        %v1762 = vpop.f32.mrb[0].mxu0
        %1763 = vmatprep.mubr.bf16.mxu0 0
        %1764 = vmatmul.mubr.bf16.gmra.mrb[0].mxu0 %v1638
        %v1765 = vpop.f32.mrb[0].mxu0
        %v1766 = vadd.f32 %v1665, %v1765
        %v1767 = vpop.f32.mrb[0].mxu0
        %v1768 = vpop.f32.mrb[0].mxu0
        %v1769 = vadd.f32 %v1665, %v1768
        %v1770 = vpop.f32.mrb[0].mxu0
        %1771 = vmatprep.mubr.bf16.mxu0 0
        %1772 = vmatmul.mubr.bf16.gmra.mrb[0].mxu0 %v1639
        %v1773 = vpop.f32.mrb[0].mxu0
        %v1774 = vadd.f32 %v1665, %v1773
        %v1775 = vpop.f32.mrb[0].mxu0
        %v1776 = vpop.f32.mrb[0].mxu0
        %v1777 = vadd.f32 %v1665, %v1776
        %v1778 = vpop.f32.mrb[0].mxu0
        %1779 = vmatprep.mubr.bf16.mxu0 0
        %1780 = vmatmul.mubr.bf16.gmra.mrb[0].mxu0 %v1640
        %v1781 = vpop.f32.mrb[0].mxu0
        %v1782 = vadd.f32 %v1665, %v1781
        %v1783 = vpop.f32.mrb[0].mxu0
        %v1784 = vpop.f32.mrb[0].mxu0
        %v1785 = vadd.f32 %v1665, %v1784
        %v1786 = vpop.f32.mrb[0].mxu0
        %1787 = vmatprep.mubr.bf16.mxu0 0
        %1788 = vmatmul.mubr.bf16.gmra.mrb[0].mxu0 %v1641
        %v1789 = vpop.f32.mrb[0].mxu0
        %v1790 = vadd.f32 %v1665, %v1789
        %v1791 = vpop.f32.mrb[0].mxu0
        %v1792 = vpop.f32.mrb[0].mxu0
        %v1793 = vadd.f32 %v1665, %v1792
        %v1794 = vpop.f32.mrb[0].mxu0
        %1795 = vmatprep.mubr.bf16.mxu0 0
        %1796 = vmatmul.mubr.bf16.gmra.mrb[0].mxu0 %v1642
        %v1797 = vpop.f32.mrb[0].mxu0
        %v1798 = vadd.f32 %v1665, %v1797
        %v1799 = vpop.f32.mrb[0].mxu0
        %v1800 = vpop.f32.mrb[0].mxu0
        %v1801 = vadd.f32 %v1665, %v1800
        %v1802 = vpop.f32.mrb[0].mxu0
        %1803 = vmatprep.mubr.bf16.mxu0 0
        %1804 = vmatmul.mubr.bf16.gmra.mrb[0].mxu0 %v1643
        %v1805 = vpop.f32.mrb[0].mxu0
        %v1806 = vadd.f32 %v1665, %v1805
        %v1807 = vpop.f32.mrb[0].mxu0
        %v1808 = vpop.f32.mrb[0].mxu0
        %v1809 = vadd.f32 %v1665, %v1808
        %v1810 = vpop.f32.mrb[0].mxu0
        %1811 = vdwg.mxu0
        %v1812 = vmax.f32 %v1750, 0.0
        %v1813 = vmax.f32 %v1753, 0.0
        %v1814 = vmax.f32 %v1758, 0.0
        %v1815 = vmax.f32 %v1761, 0.0
        %v1816 = vmax.f32 %v1766, 0.0
        %v1817 = vmax.f32 %v1769, 0.0
        %v1818 = vmax.f32 %v1774, 0.0
        %v1819 = vmax.f32 %v1777, 0.0
        %v1820 = vmax.f32 %v1782, 0.0
        %v1821 = vmax.f32 %v1785, 0.0
        %v1822 = vmax.f32 %v1790, 0.0
        %v1823 = vmax.f32 %v1793, 0.0
        %v1824 = vmax.f32 %v1798, 0.0
        %v1825 = vmax.f32 %v1801, 0.0
        %v1826 = vmax.f32 %v1806, 0.0
        %v1827 = vmax.f32 %v1809, 0.0
        %v1828 = vpack.c.bf16 %v1813, %v1812
        %v1829 = vpack.c.bf16 %v1815, %v1814
        %v1830 = vpack.c.bf16 %v1817, %v1816
        %v1831 = vpack.c.bf16 %v1819, %v1818
        %v1832 = vpack.c.bf16 %v1821, %v1820
        %v1833 = vpack.c.bf16 %v1823, %v1822
        %v1834 = vpack.c.bf16 %v1825, %v1824
        %v1835 = vpack.c.bf16 %v1827, %v1826
        %v1836 = vld [vmem:[%s14] sm:$0xf]
        %v1837 = vld [vmem:[%s14 + $0x4] sm:$0xf]
        %v1838 = vld [vmem:[%s14 + $0x8] sm:$0xf]
        %v1839 = vld [vmem:[%s14 + $0xc] sm:$0xf]
        %v1840 = vld [vmem:[%s15] sm:$0xf]
        %v1841 = vld [vmem:[%s15 + $0x4] sm:$0xf]
        %v1842 = vld [vmem:[%s15 + $0x8] sm:$0xf]
        %v1843 = vld [vmem:[%s15 + $0xc] sm:$0xf]
        %v1848 = vunpack.c.l.b16 %v1840
        %v1849 = vunpack.c.l.b16 %v1841
        %v1850 = vunpack.c.l.b16 %v1842
        %v1851 = vunpack.c.l.b16 %v1843
        %v1852 = vpack.c.b16 %v1849, %v1848
        %v1853 = vpack.c.b16 %v1851, %v1850
        %1856 = vmatprep.subr.bf16.mxu0 0
        %1857 = vmatpush1.bf16.msra.mxu0 %v1852
        %1858 = vmatprep.subr.bf16.mxu0 0
        %1859 = vmatpush1.bf16.msra.mxu0 %v1853
        %1860 = vmatprep.subr.bf16.mxu0 0
        %1861 = vmatpush1.bf16.msra.mxu0 0
        %1862 = vmatprep.subr.bf16.mxu0 0
        %1863 = vmatpush1.bf16.msra.mxu0 0
        %1864 = vmatprep.subr.bf16.mxu0 0
        %1865 = vmatpush1.bf16.msra.mxu0 0
        %1866 = vmatprep.subr.bf16.mxu0 0
        %1867 = vmatpush1.bf16.msra.mxu0 0
        %1868 = vmatprep.subr.bf16.mxu0 0
        %1869 = vmatpush1.bf16.msra.mxu0 0
        %1870 = vmatprep.subr.bf16.mxu0 0
        %1871 = vmatpush1.bf16.msra.mxu0 0
        %1872 = vmatprep.subr.bf16.mxu0 0
        %1873 = vmatpush1.bf16.msra.mxu0 0
        %1874 = vmatprep.subr.bf16.mxu0 0
        %1875 = vmatpush1.bf16.msra.mxu0 0
        %1876 = vmatprep.subr.bf16.mxu0 0
        %1877 = vmatpush1.bf16.msra.mxu0 0
        %1878 = vmatprep.subr.bf16.mxu0 0
        %1879 = vmatpush1.bf16.msra.mxu0 0
        %1880 = vmatprep.subr.bf16.mxu0 0
        %1881 = vmatpush1.bf16.msra.mxu0 0
        %1882 = vmatprep.subr.bf16.mxu0 0
        %1883 = vmatpush1.bf16.msra.mxu0 0
        %1884 = vmatprep.subr.bf16.mxu0 0
        %1885 = vmatpush1.bf16.msra.mxu0 0
        %1886 = vmatprep.subr.bf16.mxu0 0
        %1887 = vmatpush1.bf16.msra.mxu0 0
        %1888 = vmatprep.mubr.bf16.mxu0 0
        %1889 = vmatmul.mubr.bf16.gmra.mrb[0].mxu0 %v646
        %v1890 = vpop.f32.mrb[0].mxu0
        %v1891 = vadd.f32 0.0, %v1890
        %v1892 = vpop.f32.mrb[0].mxu0
        %v1893 = vpop.f32.mrb[0].mxu0
        %v1894 = vadd.f32 0.0, %v1893
        %v1895 = vpop.f32.mrb[0].mxu0
        %1896 = vmatprep.mubr.bf16.mxu0 0
        %1897 = vmatmul.mubr.bf16.gmra.mrb[0].mxu0 %v649
        %v1898 = vpop.f32.mrb[0].mxu0
        %v1899 = vadd.f32 0.0, %v1898
        %v1900 = vpop.f32.mrb[0].mxu0
        %v1901 = vpop.f32.mrb[0].mxu0
        %v1902 = vadd.f32 0.0, %v1901
        %v1903 = vpop.f32.mrb[0].mxu0
        %1904 = vmatprep.mubr.bf16.mxu0 0
        %1905 = vmatmul.mubr.bf16.gmra.mrb[0].mxu0 %v652
        %v1906 = vpop.f32.mrb[0].mxu0
        %v1907 = vadd.f32 0.0, %v1906
        %v1908 = vpop.f32.mrb[0].mxu0
        %v1909 = vpop.f32.mrb[0].mxu0
        %v1910 = vadd.f32 0.0, %v1909
        %v1911 = vpop.f32.mrb[0].mxu0
        %1912 = vmatprep.mubr.bf16.mxu0 0
        %1913 = vmatmul.mubr.bf16.gmra.mrb[0].mxu0 %v655
        %v1914 = vpop.f32.mrb[0].mxu0
        %v1915 = vadd.f32 0.0, %v1914
        %v1916 = vpop.f32.mrb[0].mxu0
        %v1917 = vpop.f32.mrb[0].mxu0
        %v1918 = vadd.f32 0.0, %v1917
        %v1919 = vpop.f32.mrb[0].mxu0
        %1920 = vmatprep.mubr.bf16.mxu0 0
        %1921 = vmatmul.mubr.bf16.gmra.mrb[0].mxu0 %v658
        %v1922 = vpop.f32.mrb[0].mxu0
        %v1923 = vadd.f32 0.0, %v1922
        %v1924 = vpop.f32.mrb[0].mxu0
        %v1925 = vpop.f32.mrb[0].mxu0
        %v1926 = vadd.f32 0.0, %v1925
        %v1927 = vpop.f32.mrb[0].mxu0
        %1928 = vmatprep.mubr.bf16.mxu0 0
        %1929 = vmatmul.mubr.bf16.gmra.mrb[0].mxu0 %v661
        %v1930 = vpop.f32.mrb[0].mxu0
        %v1931 = vadd.f32 0.0, %v1930
        %v1932 = vpop.f32.mrb[0].mxu0
        %v1933 = vpop.f32.mrb[0].mxu0
        %v1934 = vadd.f32 0.0, %v1933
        %v1935 = vpop.f32.mrb[0].mxu0
        %1936 = vmatprep.mubr.bf16.mxu0 0
        %1937 = vmatmul.mubr.bf16.gmra.mrb[0].mxu0 %v664
        %v1938 = vpop.f32.mrb[0].mxu0
        %v1939 = vadd.f32 0.0, %v1938
        %v1940 = vpop.f32.mrb[0].mxu0
        %v1941 = vpop.f32.mrb[0].mxu0
        %v1942 = vadd.f32 0.0, %v1941
        %v1943 = vpop.f32.mrb[0].mxu0
        %1944 = vmatprep.mubr.bf16.mxu0 0
        %1945 = vmatmul.mubr.bf16.gmra.mrb[0].mxu0 %v667
        %v1946 = vpop.f32.mrb[0].mxu0
        %v1947 = vadd.f32 0.0, %v1946
        %v1948 = vpop.f32.mrb[0].mxu0
        %v1949 = vpop.f32.mrb[0].mxu0
        %v1950 = vadd.f32 0.0, %v1949
        %v1951 = vpop.f32.mrb[0].mxu0
        %1952 = vdwg.mxu0
        %v1957 = vunpack.c.l.b16 %v1836
        %v1958 = vunpack.c.l.b16 %v1837
        %v1959 = vunpack.c.l.b16 %v1838
        %v1960 = vunpack.c.l.b16 %v1839
        %v1961 = vpack.c.b16 %v1958, %v1957
        %v1962 = vpack.c.b16 %v1960, %v1959
        %v1966 = vsel %vm644, %v1828, 0
        %v1969 = vsel %vm644, %v1829, 0
        %v1972 = vsel %vm644, %v1830, 0
        %v1975 = vsel %vm644, %v1831, 0
        %v1978 = vsel %vm644, %v1832, 0
        %v1981 = vsel %vm644, %v1833, 0
        %v1984 = vsel %vm644, %v1834, 0
        %v1987 = vsel %vm644, %v1835, 0
        %1989 = vmatprep.subr.bf16.mxu0 0
        %1990 = vmatpush1.bf16.msra.mxu0 %v1961
        %1991 = vmatprep.subr.bf16.mxu0 0
        %1992 = vmatpush1.bf16.msra.mxu0 %v1962
        %1993 = vmatprep.subr.bf16.mxu0 0
        %1994 = vmatpush1.bf16.msra.mxu0 0
        %1995 = vmatprep.subr.bf16.mxu0 0
        %1996 = vmatpush1.bf16.msra.mxu0 0
        %1997 = vmatprep.subr.bf16.mxu0 0
        %1998 = vmatpush1.bf16.msra.mxu0 0
        %1999 = vmatprep.subr.bf16.mxu0 0
        %2000 = vmatpush1.bf16.msra.mxu0 0
        %2001 = vmatprep.subr.bf16.mxu0 0
        %2002 = vmatpush1.bf16.msra.mxu0 0
        %2003 = vmatprep.subr.bf16.mxu0 0
        %2004 = vmatpush1.bf16.msra.mxu0 0
        %2005 = vmatprep.subr.bf16.mxu0 0
        %2006 = vmatpush1.bf16.msra.mxu0 0
        %2007 = vmatprep.subr.bf16.mxu0 0
        %2008 = vmatpush1.bf16.msra.mxu0 0
        %2009 = vmatprep.subr.bf16.mxu0 0
        %2010 = vmatpush1.bf16.msra.mxu0 0
        %2011 = vmatprep.subr.bf16.mxu0 0
        %2012 = vmatpush1.bf16.msra.mxu0 0
        %2013 = vmatprep.subr.bf16.mxu0 0
        %2014 = vmatpush1.bf16.msra.mxu0 0
        %2015 = vmatprep.subr.bf16.mxu0 0
        %2016 = vmatpush1.bf16.msra.mxu0 0
        %2017 = vmatprep.subr.bf16.mxu0 0
        %2018 = vmatpush1.bf16.msra.mxu0 0
        %2019 = vmatprep.subr.bf16.mxu0 0
        %2020 = vmatpush1.bf16.msra.mxu0 0
        %2021 = vmatprep.mubr.bf16.mxu0 0
        %2022 = vmatmul.mubr.bf16.gmra.mrb[0].mxu0 %v1966
        %v2023 = vpop.f32.mrb[0].mxu0
        %v2024 = vadd.f32 %v1891, %v2023
        %v2025 = vpop.f32.mrb[0].mxu0
        %v2026 = vpop.f32.mrb[0].mxu0
        %v2027 = vadd.f32 %v1894, %v2026
        %v2028 = vpop.f32.mrb[0].mxu0
        %2029 = vmatprep.mubr.bf16.mxu0 0
        %2030 = vmatmul.mubr.bf16.gmra.mrb[0].mxu0 %v1969
        %v2031 = vpop.f32.mrb[0].mxu0
        %v2032 = vadd.f32 %v1899, %v2031
        %v2033 = vpop.f32.mrb[0].mxu0
        %v2034 = vpop.f32.mrb[0].mxu0
        %v2035 = vadd.f32 %v1902, %v2034
        %v2036 = vpop.f32.mrb[0].mxu0
        %2037 = vmatprep.mubr.bf16.mxu0 0
        %2038 = vmatmul.mubr.bf16.gmra.mrb[0].mxu0 %v1972
        %v2039 = vpop.f32.mrb[0].mxu0
        %v2040 = vadd.f32 %v1907, %v2039
        %v2041 = vpop.f32.mrb[0].mxu0
        %v2042 = vpop.f32.mrb[0].mxu0
        %v2043 = vadd.f32 %v1910, %v2042
        %v2044 = vpop.f32.mrb[0].mxu0
        %2045 = vmatprep.mubr.bf16.mxu0 0
        %2046 = vmatmul.mubr.bf16.gmra.mrb[0].mxu0 %v1975
        %v2047 = vpop.f32.mrb[0].mxu0
        %v2048 = vadd.f32 %v1915, %v2047
        %v2049 = vpop.f32.mrb[0].mxu0
        %v2050 = vpop.f32.mrb[0].mxu0
        %v2051 = vadd.f32 %v1918, %v2050
        %v2052 = vpop.f32.mrb[0].mxu0
        %2053 = vmatprep.mubr.bf16.mxu0 0
        %2054 = vmatmul.mubr.bf16.gmra.mrb[0].mxu0 %v1978
        %v2055 = vpop.f32.mrb[0].mxu0
        %v2056 = vadd.f32 %v1923, %v2055
        %v2057 = vpop.f32.mrb[0].mxu0
        %v2058 = vpop.f32.mrb[0].mxu0
        %v2059 = vadd.f32 %v1926, %v2058
        %v2060 = vpop.f32.mrb[0].mxu0
        %2061 = vmatprep.mubr.bf16.mxu0 0
        %2062 = vmatmul.mubr.bf16.gmra.mrb[0].mxu0 %v1981
        %v2063 = vpop.f32.mrb[0].mxu0
        %v2064 = vadd.f32 %v1931, %v2063
        %v2065 = vpop.f32.mrb[0].mxu0
        %v2066 = vpop.f32.mrb[0].mxu0
        %v2067 = vadd.f32 %v1934, %v2066
        %v2068 = vpop.f32.mrb[0].mxu0
        %2069 = vmatprep.mubr.bf16.mxu0 0
        %2070 = vmatmul.mubr.bf16.gmra.mrb[0].mxu0 %v1984
        %v2071 = vpop.f32.mrb[0].mxu0
        %v2072 = vadd.f32 %v1939, %v2071
        %v2073 = vpop.f32.mrb[0].mxu0
        %v2074 = vpop.f32.mrb[0].mxu0
        %v2075 = vadd.f32 %v1942, %v2074
        %v2076 = vpop.f32.mrb[0].mxu0
        %2077 = vmatprep.mubr.bf16.mxu0 0
        %2078 = vmatmul.mubr.bf16.gmra.mrb[0].mxu0 %v1987
        %v2079 = vpop.f32.mrb[0].mxu0
        %v2080 = vadd.f32 %v1947, %v2079
        %v2081 = vpop.f32.mrb[0].mxu0
        %v2082 = vpop.f32.mrb[0].mxu0
        %v2083 = vadd.f32 %v1950, %v2082
        %v2084 = vpop.f32.mrb[0].mxu0
        %2085 = vdwg.mxu0
        %v2086 = vld [vmem:[%s16] sm:$0x1]
        %v2088 = vlaneseq
        %v2089 = vshrl.u32 %v2088, 7
        %v2090 = vsub.s32 0, %v2089
        %v2091 = vrot.slane %v2086, %v2090
        %v2093 = vadd.f32 %v2024, %v2091
        %v2094 = vadd.f32 %v2027, %v2091
        %v2095 = vadd.f32 %v2032, %v2091
        %v2096 = vadd.f32 %v2035, %v2091
        %v2097 = vadd.f32 %v2040, %v2091
        %v2098 = vadd.f32 %v2043, %v2091
        %v2099 = vadd.f32 %v2048, %v2091
        %v2100 = vadd.f32 %v2051, %v2091
        %v2101 = vadd.f32 %v2056, %v2091
        %v2102 = vadd.f32 %v2059, %v2091
        %v2103 = vadd.f32 %v2064, %v2091
        %v2104 = vadd.f32 %v2067, %v2091
        %v2105 = vadd.f32 %v2072, %v2091
        %v2106 = vadd.f32 %v2075, %v2091
        %v2107 = vadd.f32 %v2080, %v2091
        %v2108 = vadd.f32 %v2083, %v2091
        %v2109 = vmax.f32 %v2093, 0.0
        %v2110 = vmax.f32 %v2094, 0.0
        %v2111 = vmax.f32 %v2095, 0.0
        %v2112 = vmax.f32 %v2096, 0.0
        %v2113 = vmax.f32 %v2097, 0.0
        %v2114 = vmax.f32 %v2098, 0.0
        %v2115 = vmax.f32 %v2099, 0.0
        %v2116 = vmax.f32 %v2100, 0.0
        %v2117 = vmax.f32 %v2101, 0.0
        %v2118 = vmax.f32 %v2102, 0.0
        %v2119 = vmax.f32 %v2103, 0.0
        %v2120 = vmax.f32 %v2104, 0.0
        %v2121 = vmax.f32 %v2105, 0.0
        %v2122 = vmax.f32 %v2106, 0.0
        %v2123 = vmax.f32 %v2107, 0.0
        %v2124 = vmax.f32 %v2108, 0.0
        %2125 = vst [vmem:[%s579] sm:$0xff] %v2109
        %2126 = vst [vmem:[%s579 + $0x8] sm:$0xff] %v2110
        %2127 = vst [vmem:[%s579 + $0x10] sm:$0xff] %v2111
        %2128 = vst [vmem:[%s579 + $0x18] sm:$0xff] %v2112
        %2129 = vst [vmem:[%s579 + $0x20] sm:$0xff] %v2113
        %2130 = vst [vmem:[%s579 + $0x28] sm:$0xff] %v2114
        %2131 = vst [vmem:[%s579 + $0x30] sm:$0xff] %v2115
        %2132 = vst [vmem:[%s579 + $0x38] sm:$0xff] %v2116
        %2133 = vst [vmem:[%s579 + $0x40] sm:$0xff] %v2117
        %2134 = vst [vmem:[%s579 + $0x48] sm:$0xff] %v2118
        %2135 = vst [vmem:[%s579 + $0x50] sm:$0xff] %v2119
        %2136 = vst [vmem:[%s579 + $0x58] sm:$0xff] %v2120
        %2137 = vst [vmem:[%s579 + $0x60] sm:$0xff] %v2121
        %2138 = vst [vmem:[%s579 + $0x68] sm:$0xff] %v2122
        %2139 = vst [vmem:[%s579 + $0x70] sm:$0xff] %v2123
        %2140 = vst [vmem:[%s579 + $0x78] sm:$0xff] %v2124
        %s2141 = sand.u32 %s422, 1
        %s2142 = scalar_lea.sflag [#allocation3], %s2141
        %s2143 = sand.u32 %s422, 1
        %s2144 = smul.addr %s2143, 128
        %s2145 = scalar_lea.vmem [#allocation2], %s2144
        // Predicated region
        $region89: #{tpu_custom_call.1} parent=87 // pred_check
          %p2146 = pneg %p432
        $region90: #{tpu_custom_call.1} parent=87 // pred_check_branch
          %2148 = sbr.rel (%p2146) target = $region92
        $region91: #{tpu_custom_call.1} parent=87 // pred_region
          %s2149 = smul.u32 16, %s36
          %s2151 = ssub.s32 2048, 2048
          %2152 = vsyncadd %s2142, %s2151
          %s2153 = smul.addr %s35, 32
          %s2154 = sadd.s32 %s2149, %s2153
          %s2155 = smul.addr %s2154, 128
          %s2156 = scalar_lea.hbm %s17, %s2155
          %s2157 = sshll.u32 %s2145, 4
          %s2158 = int_to_ptr.vmem [resolvable:$true] %s2157
          %2163 = dma.vmem_to_hbm [thread:$0]  %s2158, 2048, %s2156, %s2142, 128, 128, 8
        $region92: #{tpu_custom_call.1} parent=87 // pred_fallthru
          _
      $region88: #{tpu_custom_call.1} parent=5 // pred_fallthru
        _
      %p2164 = scmp.le.s32.totalorder 2, %s26
      // Predicated region
      $region93: #{tpu_custom_call.1} parent=5 // pred_check
        %p2165 = pneg %p2164
      $region94: #{tpu_custom_call.1} parent=5 // pred_check_branch
        %2167 = sbr.rel (%p2165) target = $region96
      $region95: #{tpu_custom_call.1} parent=5 // pred_region
        %s2168 = ssub.s32 %s26, 2
        // Predicated region
        $region97: #{tpu_custom_call.1} parent=95 // pred_check
          %p2169 = pneg %p438
        $region98: #{tpu_custom_call.1} parent=95 // pred_check_branch
          %2171 = sbr.rel (%p2169) target = $region100
        $region99: #{tpu_custom_call.1} parent=95 // pred_region
          %s2172 = sand.u32 %s423, 1
          %s2173 = scalar_lea.sflag [#allocation3], %s2172
          %s2174 = sand.u32 %s423, 1
          %s2175 = smul.addr %s2174, 128
          %s2176 = scalar_lea.vmem [#allocation2], %s2175
          %2177 = dma.done %s2173, 2048
        $region100: #{tpu_custom_call.1} parent=95 // pred_fallthru
          _
      $region96: #{tpu_custom_call.1} parent=5 // pred_fallthru
        _
    $region6: #{tpu_custom_call.1} parent=1 // loop_footer
      %s30 = sadd.s32 1, %s26
    $region7: #{tpu_custom_call.1} parent=1 // loop_footer_branch
      %25 = sbr.rel target = $region3
    $region8: #{tpu_custom_call.1} parent=1 // loop_exit
      _
    %2178 = vsyncpa [#allocation3], 1
    %s2179 = scalar_lea.sflag [#allocation3], 1
    %2180 = vsyncpa %s2179, 1

</llo_original>
